<compile_context>
chip_gen: v7x
topology: tpu7x:2x2x1
jax: 0.10.0
libtpu: 0.0.40
codegen_flags: <defaults>
</compile_context>

<pallas_src>
import math

import jax
import jax.numpy as jnp
from jax.experimental import pallas as pl
from jax.experimental.pallas import tpu as pltpu

# ------------------------- model hyper-parameters --------------------------
B = 2          # batch
T = 8          # sequence length
D_MODEL = 32   # d_model
D_FF = 64      # d_ff
N_HEADS = 4    # attn_n_heads
D_K = D_MODEL // N_HEADS
LN_EPS = 1e-6  # layer_norm_eps
NEG_INF = -1.0e30


# ------------------------------ Pallas kernel ------------------------------
def encoder_block_kernel(
    x_ref,                              # (B*T, D_MODEL)  f32  VMEM
    xlens_ref,                          # (B,)            i32  SMEM
    ln1_g_ref, ln1_b_ref,               # (1, D_MODEL)
    wqkv_ref, bqkv_ref,                 # (D_MODEL, 3*D_MODEL), (1, 3*D_MODEL)
    wo_ref, bo_ref,                     # (D_MODEL, D_MODEL), (1, D_MODEL)
    ln2_g_ref, ln2_b_ref,               # (1, D_MODEL)
    w1_ref, b1_ref, w2_ref, b2_ref,     # (D,D_FF)/(1,D_FF)/(D_FF,D)/(1,D)
    out_ref,                            # (B*T, D_MODEL)
    aw_ref,                             # (B, N_HEADS, T, T)
):
    x = x_ref[...]                                           # (B*T, D)

    # ---- LayerNorm 1 (pre-norm for self-attention), whole-batch slab ----
    mu1 = jnp.mean(x, axis=-1, keepdims=True)
    var1 = jnp.mean((x - mu1) ** 2, axis=-1, keepdims=True)
    xn = (x - mu1) * jax.lax.rsqrt(var1 + LN_EPS) * ln1_g_ref[0] + ln1_b_ref[0]

    # ---- fused Q/K/V projection (1/sqrt(d_k) already folded into Q part) ----
    qkv = jnp.dot(xn, wqkv_ref[...], preferred_element_type=jnp.float32) + bqkv_ref[0]
    q = qkv[:, :D_MODEL]
    k = qkv[:, D_MODEL:2 * D_MODEL]
    v = qkv[:, 2 * D_MODEL:]

    col = jax.lax.broadcasted_iota(jnp.int32, (T, T), 1)     # key position index

    # ---- attention scores for all (batch, head), assembled into one slab ----
    e_batches = []
    for b in range(B):                                       # static unroll (B=2)
        qb = q[b * T:(b + 1) * T]
        kb = k[b * T:(b + 1) * T]
        valid = col < xlens_ref[b]                           # key-padding mask
        e_heads = []
        for h in range(N_HEADS):                             # static unroll (H=4)
            qh = qb[:, h * D_K:(h + 1) * D_K]
            kh = kb[:, h * D_K:(h + 1) * D_K]
            # contract feature dim of both operands -> no explicit kh.T
            e_heads.append(jax.lax.dot_general(
                qh, kh, (((1,), (1,)), ((), ())),
                preferred_element_type=jnp.float32))
        eb = jnp.stack(e_heads, axis=0)                      # (H, T, T)
        e_batches.append(jnp.where(valid[None], eb, NEG_INF))
    e_all = jnp.stack(e_batches, axis=0)                     # (B, H, T, T)

    # ---- softmax once over the whole slab ----
    e_all = e_all - jnp.max(e_all, axis=-1, keepdims=True)
    p = jnp.exp(e_all)
    denom = jnp.sum(p, axis=-1, keepdims=True)
    r = pl.reciprocal(denom, approx=True)                    # EUP vrcp
    r = r * (2.0 - denom * r)                                # Newton step -> f32 acc.
    aw = p * r
    aw_ref[...] = aw                                         # single stacked store

    # ---- context + output projection ----
    ctx_rows = []
    for b in range(B):
        vb = v[b * T:(b + 1) * T]
        parts = [jnp.dot(aw[b, h], vb[:, h * D_K:(h + 1) * D_K],
                         preferred_element_type=jnp.float32)
                 for h in range(N_HEADS)]
        ctx_rows.append(jnp.concatenate(parts, axis=-1))     # (T, D)
    ctx = jnp.concatenate(ctx_rows, axis=0)                  # (B*T, D)

    attn_out = jnp.dot(ctx, wo_ref[...], preferred_element_type=jnp.float32) + bo_ref[0]
    x1 = x + attn_out                                        # residual 1

    # ---- LayerNorm 2 (pre-norm for feed-forward) ----
    mu2 = jnp.mean(x1, axis=-1, keepdims=True)
    var2 = jnp.mean((x1 - mu2) ** 2, axis=-1, keepdims=True)
    xn2 = (x1 - mu2) * jax.lax.rsqrt(var2 + LN_EPS) * ln2_g_ref[0] + ln2_b_ref[0]

    # ---- position-wise feed-forward ----
    h1 = jnp.maximum(
        jnp.dot(xn2, w1_ref[...], preferred_element_type=jnp.float32) + b1_ref[0], 0.0)
    ff = jnp.dot(h1, w2_ref[...], preferred_element_type=jnp.float32) + b2_ref[0]

    out_ref[...] = x1 + ff                                   # residual 2


# ------------------------------- wrapper ------------------------------------
def transformer_encoder_block(xs, xlens, params):
    """xs: [B, T, D_MODEL] f32, xlens: [B] int32 -> (xs_out, attn_weights)."""
    Bx, Tx, Dx = xs.shape
    xs2 = xs.reshape(Bx * Tx, Dx)                            # lane/sublane-dense slab

    # Parameter prep (outside the kernel): fuse QKV, fold attention scale into Q.
    scale = 1.0 / math.sqrt(D_K)
    wqkv = jnp.concatenate([params["wq"] * scale, params["wk"], params["wv"]], axis=1)
    bqkv = jnp.concatenate([params["bq"] * scale, params["bk"], params["bv"]], axis=1)

    vmem = pl.BlockSpec(memory_space=pltpu.MemorySpace.VMEM)
    smem = pl.BlockSpec(memory_space=pltpu.MemorySpace.SMEM)

    in_specs = [vmem, smem] + [vmem] * 12
    out_specs = (vmem, vmem)
    out_shape = (
        jax.ShapeDtypeStruct((Bx * Tx, Dx), jnp.float32),
        jax.ShapeDtypeStruct((Bx, N_HEADS, Tx, Tx), jnp.float32),
    )

    fn = pl.pallas_call(                                     # single invocation, no grid
        encoder_block_kernel,
        out_shape=out_shape,
        in_specs=in_specs,
        out_specs=out_specs,
    )
    out2, aw = fn(
        xs2, xlens,
        params["ln1_g"], params["ln1_b"],
        wqkv, bqkv,
        params["wo"], params["bo"],
        params["ln2_g"], params["ln2_b"],
        params["w1"], params["b1"], params["w2"], params["b2"],
    )
    return out2.reshape(Bx, Tx, Dx), aw


# --------------------------- pure-JAX reference -----------------------------
def reference(xs, xlens, p):
    def ln(x, g, b):
        mu = x.mean(-1, keepdims=True)
        var = ((x - mu) ** 2).mean(-1, keepdims=True)
        return (x - mu) * jax.lax.rsqrt(var + LN_EPS) * g[0] + b[0]

    xn = ln(xs, p["ln1_g"], p["ln1_b"])
    q = xn @ p["wq"] + p["bq"][0]
    k = xn @ p["wk"] + p["bk"][0]
    v = xn @ p["wv"] + p["bv"][0]
    qh = q.reshape(B, T, N_HEADS, D_K).transpose(0, 2, 1, 3)
    kh = k.reshape(B, T, N_HEADS, D_K).transpose(0, 2, 1, 3)
    vh = v.reshape(B, T, N_HEADS, D_K).transpose(0, 2, 1, 3)
    e = jnp.einsum("bhqd,bhkd->bhqk", qh, kh) / math.sqrt(D_K)
    valid = (jnp.arange(T)[None, :] < xlens[:, None])[:, None, None, :]
    e = jnp.where(valid, e, NEG_INF)
    aw = jax.nn.softmax(e, axis=-1)
    ctx = jnp.einsum("bhqk,bhkd->bhqd", aw, vh)
    ctx = ctx.transpose(0, 2, 1, 3).reshape(B, T, D_MODEL)
    x1 = xs + (ctx @ p["wo"] + p["bo"][0])
    xn2 = ln(x1, p["ln2_g"], p["ln2_b"])
    ff = jnp.maximum(xn2 @ p["w1"] + p["b1"][0], 0.0) @ p["w2"] + p["b2"][0]
    return x1 + ff, aw


# --------------------------------- main --------------------------------------
if __name__ == "__main__":
    key = jax.random.PRNGKey(0)
    keys = jax.random.split(key, 8)

    xs = jax.random.normal(keys[0], (B, T, D_MODEL), dtype=jnp.float32)
    xlens = jnp.array([T, T - 3], dtype=jnp.int32)

    def w(k, shape, scale=0.05):
        return (scale * jax.random.normal(k, shape)).astype(jnp.float32)

    params = {
        "ln1_g": jnp.ones((1, D_MODEL), jnp.float32),
        "ln1_b": jnp.zeros((1, D_MODEL), jnp.float32),
        "wq": w(keys[1], (D_MODEL, D_MODEL)), "bq": jnp.zeros((1, D_MODEL), jnp.float32),
        "wk": w(keys[2], (D_MODEL, D_MODEL)), "bk": jnp.zeros((1, D_MODEL), jnp.float32),
        "wv": w(keys[3], (D_MODEL, D_MODEL)), "bv": jnp.zeros((1, D_MODEL), jnp.float32),
        "wo": w(keys[4], (D_MODEL, D_MODEL)), "bo": jnp.zeros((1, D_MODEL), jnp.float32),
        "ln2_g": jnp.ones((1, D_MODEL), jnp.float32),
        "ln2_b": jnp.zeros((1, D_MODEL), jnp.float32),
        "w1": w(keys[5], (D_MODEL, D_FF)), "b1": jnp.zeros((1, D_FF), jnp.float32),
        "w2": w(keys[6], (D_FF, D_MODEL)), "b2": jnp.zeros((1, D_MODEL), jnp.float32),
    }

    out, aw = transformer_encoder_block(xs, xlens, params)
    out = jax.block_until_ready(out)
    aw = jax.block_until_ready(aw)

    ref_out, ref_aw = reference(xs, xlens, params)
    assert out.shape == (B, T, D_MODEL) and aw.shape == (B, N_HEADS, T, T)
    assert jnp.allclose(out, ref_out, rtol=1e-4, atol=1e-4)
    assert jnp.allclose(aw, ref_aw, rtol=1e-4, atol=1e-4)

    print("KERNEL_OK")
</pallas_src>

<mosaic_0001>
module attributes {stable_mosaic.version = 11 : i64} {
  func.func @encoder_block_kernel(%arg0: memref<16x32xf32, #tpu.memory_space<vmem>>, %arg1: memref<2xi32, #tpu.memory_space<smem>>, %arg2: memref<1x32xf32, #tpu.memory_space<vmem>>, %arg3: memref<1x32xf32, #tpu.memory_space<vmem>>, %arg4: memref<32x96xf32, #tpu.memory_space<vmem>>, %arg5: memref<1x96xf32, #tpu.memory_space<vmem>>, %arg6: memref<32x32xf32, #tpu.memory_space<vmem>>, %arg7: memref<1x32xf32, #tpu.memory_space<vmem>>, %arg8: memref<1x32xf32, #tpu.memory_space<vmem>>, %arg9: memref<1x32xf32, #tpu.memory_space<vmem>>, %arg10: memref<32x64xf32, #tpu.memory_space<vmem>>, %arg11: memref<1x64xf32, #tpu.memory_space<vmem>>, %arg12: memref<64x32xf32, #tpu.memory_space<vmem>>, %arg13: memref<1x32xf32, #tpu.memory_space<vmem>>, %arg14: memref<16x32xf32, #tpu.memory_space<vmem>>, %arg15: memref<2x4x8x8xf32, #tpu.memory_space<vmem>>) attributes {dimension_semantics = [], scalar_prefetch = 0 : i64, scratch_operands = 0 : i64, tpu.core_type = #tpu.core_type<tc>} {
    %c0 = arith.constant 0 : index
    %c0_0 = arith.constant 0 : index
    %0 = vector.load %arg0[%c0, %c0_0] : memref<16x32xf32, #tpu.memory_space<vmem>>, vector<16x32xf32>
    %cst = arith.constant dense<0.000000e+00> : vector<16xf32>
    %1 = vector.multi_reduction <add>, %0, %cst [1] : vector<16x32xf32> to vector<16xf32>
    %2 = vector.shape_cast %1 : vector<16xf32> to vector<16x1xf32>
    %cst_1 = arith.constant 3.200000e+01 : f32
    %3 = vector.broadcast %cst_1 : f32 to vector<16x1xf32>
    %4 = arith.divf %2, %3 : vector<16x1xf32>
    %5 = vector.broadcast %4 : vector<16x1xf32> to vector<16x32xf32>
    %6 = arith.subf %0, %5 : vector<16x32xf32>
    %7 = arith.mulf %6, %6 : vector<16x32xf32>
    %cst_2 = arith.constant dense<0.000000e+00> : vector<16xf32>
    %8 = vector.multi_reduction <add>, %7, %cst_2 [1] : vector<16x32xf32> to vector<16xf32>
    %9 = vector.shape_cast %8 : vector<16xf32> to vector<16x1xf32>
    %cst_3 = arith.constant 3.200000e+01 : f32
    %10 = vector.broadcast %cst_3 : f32 to vector<16x1xf32>
    %11 = arith.divf %9, %10 : vector<16x1xf32>
    %12 = vector.broadcast %4 : vector<16x1xf32> to vector<16x32xf32>
    %13 = arith.subf %0, %12 : vector<16x32xf32>
    %cst_4 = arith.constant 9.99999997E-7 : f32
    %14 = vector.broadcast %cst_4 : f32 to vector<16x1xf32>
    %15 = arith.addf %11, %14 : vector<16x1xf32>
    %16 = math.rsqrt %15 : vector<16x1xf32>
    %17 = vector.broadcast %16 : vector<16x1xf32> to vector<16x32xf32>
    %18 = arith.mulf %13, %17 : vector<16x32xf32>
    %c0_5 = arith.constant 0 : index
    %c0_6 = arith.constant 0 : index
    %19 = vector.load %arg2[%c0_5, %c0_6] : memref<1x32xf32, #tpu.memory_space<vmem>>, vector<1x32xf32>
    %20 = vector.shape_cast %19 : vector<1x32xf32> to vector<32xf32>
    %21 = vector.shape_cast %20 : vector<32xf32> to vector<1x32xf32>
    %22 = vector.broadcast %21 : vector<1x32xf32> to vector<16x32xf32>
    %23 = arith.mulf %18, %22 : vector<16x32xf32>
    %c0_7 = arith.constant 0 : index
    %c0_8 = arith.constant 0 : index
    %24 = vector.load %arg3[%c0_7, %c0_8] : memref<1x32xf32, #tpu.memory_space<vmem>>, vector<1x32xf32>
    %25 = vector.shape_cast %24 : vector<1x32xf32> to vector<32xf32>
    %26 = vector.shape_cast %25 : vector<32xf32> to vector<1x32xf32>
    %27 = vector.broadcast %26 : vector<1x32xf32> to vector<16x32xf32>
    %28 = arith.addf %23, %27 : vector<16x32xf32>
    %c0_9 = arith.constant 0 : index
    %c0_10 = arith.constant 0 : index
    %29 = vector.load %arg4[%c0_9, %c0_10] : memref<32x96xf32, #tpu.memory_space<vmem>>, vector<32x96xf32>
    %cst_11 = arith.constant dense<0.000000e+00> : vector<16x96xf32>
    %30 = tpu.matmul %28, %29, %cst_11 {dimension_numbers = #tpu.dot_dimension_numbers<[1], [0], [0], [1], [0, 0, 1, 1], [], []>} : vector<16x32xf32>, vector<32x96xf32>, vector<16x96xf32> -> vector<16x96xf32>
    %c0_12 = arith.constant 0 : index
    %c0_13 = arith.constant 0 : index
    %31 = vector.load %arg5[%c0_12, %c0_13] : memref<1x96xf32, #tpu.memory_space<vmem>>, vector<1x96xf32>
    %32 = vector.shape_cast %31 : vector<1x96xf32> to vector<96xf32>
    %33 = vector.shape_cast %32 : vector<96xf32> to vector<1x96xf32>
    %34 = vector.broadcast %33 : vector<1x96xf32> to vector<16x96xf32>
    %35 = arith.addf %30, %34 : vector<16x96xf32>
    %36 = vector.extract_strided_slice %35 {offsets = [0, 0], sizes = [16, 32], strides = [1, 1]} : vector<16x96xf32> to vector<16x32xf32>
    %37 = vector.extract_strided_slice %35 {offsets = [0, 32], sizes = [16, 32], strides = [1, 1]} : vector<16x96xf32> to vector<16x32xf32>
    %38 = vector.extract_strided_slice %35 {offsets = [0, 64], sizes = [16, 32], strides = [1, 1]} : vector<16x96xf32> to vector<16x32xf32>
    %39 = tpu.iota {dimensions = array<i32: 1>} : vector<8x8xi32>
    %40 = vector.extract_strided_slice %36 {offsets = [0, 0], sizes = [8, 32], strides = [1, 1]} : vector<16x32xf32> to vector<8x32xf32>
    %41 = vector.extract_strided_slice %37 {offsets = [0, 0], sizes = [8, 32], strides = [1, 1]} : vector<16x32xf32> to vector<8x32xf32>
    %c0_14 = arith.constant 0 : index
    %42 = memref.load %arg1[%c0_14] : memref<2xi32, #tpu.memory_space<smem>>
    %43 = vector.broadcast %42 : i32 to vector<8x8xi32>
    %44 = arith.cmpi slt, %39, %43 : vector<8x8xi32>
    %45 = vector.extract_strided_slice %40 {offsets = [0, 0], sizes = [8, 8], strides = [1, 1]} : vector<8x32xf32> to vector<8x8xf32>
    %46 = vector.extract_strided_slice %41 {offsets = [0, 0], sizes = [8, 8], strides = [1, 1]} : vector<8x32xf32> to vector<8x8xf32>
    %cst_15 = arith.constant dense<0.000000e+00> : vector<8x8xf32>
    %47 = tpu.matmul %45, %46, %cst_15 {dimension_numbers = #tpu.dot_dimension_numbers<[1], [1], [0], [0], [0, 0, 1, 0], [], []>} : vector<8x8xf32>, vector<8x8xf32>, vector<8x8xf32> -> vector<8x8xf32>
    %48 = vector.extract_strided_slice %40 {offsets = [0, 8], sizes = [8, 8], strides = [1, 1]} : vector<8x32xf32> to vector<8x8xf32>
    %49 = vector.extract_strided_slice %41 {offsets = [0, 8], sizes = [8, 8], strides = [1, 1]} : vector<8x32xf32> to vector<8x8xf32>
    %cst_16 = arith.constant dense<0.000000e+00> : vector<8x8xf32>
    %50 = tpu.matmul %48, %49, %cst_16 {dimension_numbers = #tpu.dot_dimension_numbers<[1], [1], [0], [0], [0, 0, 1, 0], [], []>} : vector<8x8xf32>, vector<8x8xf32>, vector<8x8xf32> -> vector<8x8xf32>
    %51 = vector.extract_strided_slice %40 {offsets = [0, 16], sizes = [8, 8], strides = [1, 1]} : vector<8x32xf32> to vector<8x8xf32>
    %52 = vector.extract_strided_slice %41 {offsets = [0, 16], sizes = [8, 8], strides = [1, 1]} : vector<8x32xf32> to vector<8x8xf32>
    %cst_17 = arith.constant dense<0.000000e+00> : vector<8x8xf32>
    %53 = tpu.matmul %51, %52, %cst_17 {dimension_numbers = #tpu.dot_dimension_numbers<[1], [1], [0], [0], [0, 0, 1, 0], [], []>} : vector<8x8xf32>, vector<8x8xf32>, vector<8x8xf32> -> vector<8x8xf32>
    %54 = vector.extract_strided_slice %40 {offsets = [0, 24], sizes = [8, 8], strides = [1, 1]} : vector<8x32xf32> to vector<8x8xf32>
    %55 = vector.extract_strided_slice %41 {offsets = [0, 24], sizes = [8, 8], strides = [1, 1]} : vector<8x32xf32> to vector<8x8xf32>
    %cst_18 = arith.constant dense<0.000000e+00> : vector<8x8xf32>
    %56 = tpu.matmul %54, %55, %cst_18 {dimension_numbers = #tpu.dot_dimension_numbers<[1], [1], [0], [0], [0, 0, 1, 0], [], []>} : vector<8x8xf32>, vector<8x8xf32>, vector<8x8xf32> -> vector<8x8xf32>
    %57 = vector.shape_cast %47 : vector<8x8xf32> to vector<1x8x8xf32>
    %58 = vector.shape_cast %50 : vector<8x8xf32> to vector<1x8x8xf32>
    %59 = vector.shape_cast %53 : vector<8x8xf32> to vector<1x8x8xf32>
    %60 = vector.shape_cast %56 : vector<8x8xf32> to vector<1x8x8xf32>
    %61 = tpu.concatenate %57, %58, %59, %60 in 0 : vector<1x8x8xf32>, vector<1x8x8xf32>, vector<1x8x8xf32>, vector<1x8x8xf32> -> vector<4x8x8xf32>
    %62 = vector.shape_cast %44 : vector<8x8xi1> to vector<1x8x8xi1>
    %cst_19 = arith.constant -1.000000e+30 : f32
    %63 = vector.shape_cast %62 : vector<1x8x8xi1> to vector<1x8x8xi1>
    %64 = vector.broadcast %63 : vector<1x8x8xi1> to vector<4x8x8xi1>
    %65 = vector.broadcast %cst_19 : f32 to vector<4x8x8xf32>
    %66 = arith.select %64, %61, %65 : vector<4x8x8xi1>, vector<4x8x8xf32>
    %67 = vector.extract_strided_slice %36 {offsets = [8, 0], sizes = [8, 32], strides = [1, 1]} : vector<16x32xf32> to vector<8x32xf32>
    %68 = vector.extract_strided_slice %37 {offsets = [8, 0], sizes = [8, 32], strides = [1, 1]} : vector<16x32xf32> to vector<8x32xf32>
    %c1 = arith.constant 1 : index
    %69 = memref.load %arg1[%c1] : memref<2xi32, #tpu.memory_space<smem>>
    %70 = vector.broadcast %69 : i32 to vector<8x8xi32>
    %71 = arith.cmpi slt, %39, %70 : vector<8x8xi32>
    %72 = vector.extract_strided_slice %67 {offsets = [0, 0], sizes = [8, 8], strides = [1, 1]} : vector<8x32xf32> to vector<8x8xf32>
    %73 = vector.extract_strided_slice %68 {offsets = [0, 0], sizes = [8, 8], strides = [1, 1]} : vector<8x32xf32> to vector<8x8xf32>
    %cst_20 = arith.constant dense<0.000000e+00> : vector<8x8xf32>
    %74 = tpu.matmul %72, %73, %cst_20 {dimension_numbers = #tpu.dot_dimension_numbers<[1], [1], [0], [0], [0, 0, 1, 0], [], []>} : vector<8x8xf32>, vector<8x8xf32>, vector<8x8xf32> -> vector<8x8xf32>
    %75 = vector.extract_strided_slice %67 {offsets = [0, 8], sizes = [8, 8], strides = [1, 1]} : vector<8x32xf32> to vector<8x8xf32>
    %76 = vector.extract_strided_slice %68 {offsets = [0, 8], sizes = [8, 8], strides = [1, 1]} : vector<8x32xf32> to vector<8x8xf32>
    %cst_21 = arith.constant dense<0.000000e+00> : vector<8x8xf32>
    %77 = tpu.matmul %75, %76, %cst_21 {dimension_numbers = #tpu.dot_dimension_numbers<[1], [1], [0], [0], [0, 0, 1, 0], [], []>} : vector<8x8xf32>, vector<8x8xf32>, vector<8x8xf32> -> vector<8x8xf32>
    %78 = vector.extract_strided_slice %67 {offsets = [0, 16], sizes = [8, 8], strides = [1, 1]} : vector<8x32xf32> to vector<8x8xf32>
    %79 = vector.extract_strided_slice %68 {offsets = [0, 16], sizes = [8, 8], strides = [1, 1]} : vector<8x32xf32> to vector<8x8xf32>
    %cst_22 = arith.constant dense<0.000000e+00> : vector<8x8xf32>
    %80 = tpu.matmul %78, %79, %cst_22 {dimension_numbers = #tpu.dot_dimension_numbers<[1], [1], [0], [0], [0, 0, 1, 0], [], []>} : vector<8x8xf32>, vector<8x8xf32>, vector<8x8xf32> -> vector<8x8xf32>
    %81 = vector.extract_strided_slice %67 {offsets = [0, 24], sizes = [8, 8], strides = [1, 1]} : vector<8x32xf32> to vector<8x8xf32>
    %82 = vector.extract_strided_slice %68 {offsets = [0, 24], sizes = [8, 8], strides = [1, 1]} : vector<8x32xf32> to vector<8x8xf32>
    %cst_23 = arith.constant dense<0.000000e+00> : vector<8x8xf32>
    %83 = tpu.matmul %81, %82, %cst_23 {dimension_numbers = #tpu.dot_dimension_numbers<[1], [1], [0], [0], [0, 0, 1, 0], [], []>} : vector<8x8xf32>, vector<8x8xf32>, vector<8x8xf32> -> vector<8x8xf32>
    %84 = vector.shape_cast %74 : vector<8x8xf32> to vector<1x8x8xf32>
    %85 = vector.shape_cast %77 : vector<8x8xf32> to vector<1x8x8xf32>
    %86 = vector.shape_cast %80 : vector<8x8xf32> to vector<1x8x8xf32>
    %87 = vector.shape_cast %83 : vector<8x8xf32> to vector<1x8x8xf32>
    %88 = tpu.concatenate %84, %85, %86, %87 in 0 : vector<1x8x8xf32>, vector<1x8x8xf32>, vector<1x8x8xf32>, vector<1x8x8xf32> -> vector<4x8x8xf32>
    %89 = vector.shape_cast %71 : vector<8x8xi1> to vector<1x8x8xi1>
    %cst_24 = arith.constant -1.000000e+30 : f32
    %90 = vector.shape_cast %89 : vector<1x8x8xi1> to vector<1x8x8xi1>
    %91 = vector.broadcast %90 : vector<1x8x8xi1> to vector<4x8x8xi1>
    %92 = vector.broadcast %cst_24 : f32 to vector<4x8x8xf32>
    %93 = arith.select %91, %88, %92 : vector<4x8x8xi1>, vector<4x8x8xf32>
    %94 = vector.shape_cast %66 : vector<4x8x8xf32> to vector<1x4x8x8xf32>
    %95 = vector.shape_cast %93 : vector<4x8x8xf32> to vector<1x4x8x8xf32>
    %96 = tpu.concatenate %94, %95 in 0 : vector<1x4x8x8xf32>, vector<1x4x8x8xf32> -> vector<2x4x8x8xf32>
    %cst_25 = arith.constant dense<0xFF800000> : vector<2x4x8xf32>
    %97 = vector.multi_reduction <maximumf>, %96, %cst_25 [3] : vector<2x4x8x8xf32> to vector<2x4x8xf32>
    %98 = vector.shape_cast %97 : vector<2x4x8xf32> to vector<2x4x8x1xf32>
    %99 = vector.broadcast %98 : vector<2x4x8x1xf32> to vector<2x4x8x8xf32>
    %100 = arith.subf %96, %99 : vector<2x4x8x8xf32>
    %101 = math.exp %100 : vector<2x4x8x8xf32>
    %cst_26 = arith.constant dense<0.000000e+00> : vector<2x4x8xf32>
    %102 = vector.multi_reduction <add>, %101, %cst_26 [3] : vector<2x4x8x8xf32> to vector<2x4x8xf32>
    %103 = vector.shape_cast %102 : vector<2x4x8xf32> to vector<2x4x8x1xf32>
    %104 = tpu.reciprocal %103 {approx = true} : vector<2x4x8x1xf32> -> vector<2x4x8x1xf32>
    %105 = arith.mulf %103, %104 : vector<2x4x8x1xf32>
    %cst_27 = arith.constant 2.000000e+00 : f32
    %106 = vector.broadcast %cst_27 : f32 to vector<2x4x8x1xf32>
    %107 = arith.subf %106, %105 : vector<2x4x8x1xf32>
    %108 = arith.mulf %104, %107 : vector<2x4x8x1xf32>
    %109 = vector.broadcast %108 : vector<2x4x8x1xf32> to vector<2x4x8x8xf32>
    %110 = arith.mulf %101, %109 : vector<2x4x8x8xf32>
    %c0_28 = arith.constant 0 : index
    %c0_29 = arith.constant 0 : index
    %c0_30 = arith.constant 0 : index
    %c0_31 = arith.constant 0 : index
    %111 = vector.load %arg15[%c0_28, %c0_29, %c0_30, %c0_31] : memref<2x4x8x8xf32, #tpu.memory_space<vmem>>, vector<2x4x8x8xf32>
    tpu.vector_store %arg15[%c0_28, %c0_29, %c0_30, %c0_31], %110 {strides = array<i32>} : memref<2x4x8x8xf32, #tpu.memory_space<vmem>>, vector<2x4x8x8xf32>,
    %112 = vector.extract_strided_slice %38 {offsets = [0, 0], sizes = [8, 32], strides = [1, 1]} : vector<16x32xf32> to vector<8x32xf32>
    %113 = vector.extract_strided_slice %110 {offsets = [0, 0, 0, 0], sizes = [1, 1, 8, 8], strides = [1, 1, 1, 1]} : vector<2x4x8x8xf32> to vector<1x1x8x8xf32>
    %114 = vector.shape_cast %113 : vector<1x1x8x8xf32> to vector<8x8xf32>
    %115 = vector.extract_strided_slice %112 {offsets = [0, 0], sizes = [8, 8], strides = [1, 1]} : vector<8x32xf32> to vector<8x8xf32>
    %cst_32 = arith.constant dense<0.000000e+00> : vector<8x8xf32>
    %116 = tpu.matmul %114, %115, %cst_32 {dimension_numbers = #tpu.dot_dimension_numbers<[1], [0], [0], [1], [0, 0, 1, 1], [], []>} : vector<8x8xf32>, vector<8x8xf32>, vector<8x8xf32> -> vector<8x8xf32>
    %117 = vector.extract_strided_slice %110 {offsets = [0, 1, 0, 0], sizes = [1, 1, 8, 8], strides = [1, 1, 1, 1]} : vector<2x4x8x8xf32> to vector<1x1x8x8xf32>
    %118 = vector.shape_cast %117 : vector<1x1x8x8xf32> to vector<8x8xf32>
    %119 = vector.extract_strided_slice %112 {offsets = [0, 8], sizes = [8, 8], strides = [1, 1]} : vector<8x32xf32> to vector<8x8xf32>
    %cst_33 = arith.constant dense<0.000000e+00> : vector<8x8xf32>
    %120 = tpu.matmul %118, %119, %cst_33 {dimension_numbers = #tpu.dot_dimension_numbers<[1], [0], [0], [1], [0, 0, 1, 1], [], []>} : vector<8x8xf32>, vector<8x8xf32>, vector<8x8xf32> -> vector<8x8xf32>
    %121 = vector.extract_strided_slice %110 {offsets = [0, 2, 0, 0], sizes = [1, 1, 8, 8], strides = [1, 1, 1, 1]} : vector<2x4x8x8xf32> to vector<1x1x8x8xf32>
    %122 = vector.shape_cast %121 : vector<1x1x8x8xf32> to vector<8x8xf32>
    %123 = vector.extract_strided_slice %112 {offsets = [0, 16], sizes = [8, 8], strides = [1, 1]} : vector<8x32xf32> to vector<8x8xf32>
    %cst_34 = arith.constant dense<0.000000e+00> : vector<8x8xf32>
    %124 = tpu.matmul %122, %123, %cst_34 {dimension_numbers = #tpu.dot_dimension_numbers<[1], [0], [0], [1], [0, 0, 1, 1], [], []>} : vector<8x8xf32>, vector<8x8xf32>, vector<8x8xf32> -> vector<8x8xf32>
    %125 = vector.extract_strided_slice %110 {offsets = [0, 3, 0, 0], sizes = [1, 1, 8, 8], strides = [1, 1, 1, 1]} : vector<2x4x8x8xf32> to vector<1x1x8x8xf32>
    %126 = vector.shape_cast %125 : vector<1x1x8x8xf32> to vector<8x8xf32>
    %127 = vector.extract_strided_slice %112 {offsets = [0, 24], sizes = [8, 8], strides = [1, 1]} : vector<8x32xf32> to vector<8x8xf32>
    %cst_35 = arith.constant dense<0.000000e+00> : vector<8x8xf32>
    %128 = tpu.matmul %126, %127, %cst_35 {dimension_numbers = #tpu.dot_dimension_numbers<[1], [0], [0], [1], [0, 0, 1, 1], [], []>} : vector<8x8xf32>, vector<8x8xf32>, vector<8x8xf32> -> vector<8x8xf32>
    %129 = tpu.concatenate %116, %120, %124, %128 in 1 : vector<8x8xf32>, vector<8x8xf32>, vector<8x8xf32>, vector<8x8xf32> -> vector<8x32xf32>
    %130 = vector.extract_strided_slice %38 {offsets = [8, 0], sizes = [8, 32], strides = [1, 1]} : vector<16x32xf32> to vector<8x32xf32>
    %131 = vector.extract_strided_slice %110 {offsets = [1, 0, 0, 0], sizes = [1, 1, 8, 8], strides = [1, 1, 1, 1]} : vector<2x4x8x8xf32> to vector<1x1x8x8xf32>
    %132 = vector.shape_cast %131 : vector<1x1x8x8xf32> to vector<8x8xf32>
    %133 = vector.extract_strided_slice %130 {offsets = [0, 0], sizes = [8, 8], strides = [1, 1]} : vector<8x32xf32> to vector<8x8xf32>
    %cst_36 = arith.constant dense<0.000000e+00> : vector<8x8xf32>
    %134 = tpu.matmul %132, %133, %cst_36 {dimension_numbers = #tpu.dot_dimension_numbers<[1], [0], [0], [1], [0, 0, 1, 1], [], []>} : vector<8x8xf32>, vector<8x8xf32>, vector<8x8xf32> -> vector<8x8xf32>
    %135 = vector.extract_strided_slice %110 {offsets = [1, 1, 0, 0], sizes = [1, 1, 8, 8], strides = [1, 1, 1, 1]} : vector<2x4x8x8xf32> to vector<1x1x8x8xf32>
    %136 = vector.shape_cast %135 : vector<1x1x8x8xf32> to vector<8x8xf32>
    %137 = vector.extract_strided_slice %130 {offsets = [0, 8], sizes = [8, 8], strides = [1, 1]} : vector<8x32xf32> to vector<8x8xf32>
    %cst_37 = arith.constant dense<0.000000e+00> : vector<8x8xf32>
    %138 = tpu.matmul %136, %137, %cst_37 {dimension_numbers = #tpu.dot_dimension_numbers<[1], [0], [0], [1], [0, 0, 1, 1], [], []>} : vector<8x8xf32>, vector<8x8xf32>, vector<8x8xf32> -> vector<8x8xf32>
    %139 = vector.extract_strided_slice %110 {offsets = [1, 2, 0, 0], sizes = [1, 1, 8, 8], strides = [1, 1, 1, 1]} : vector<2x4x8x8xf32> to vector<1x1x8x8xf32>
    %140 = vector.shape_cast %139 : vector<1x1x8x8xf32> to vector<8x8xf32>
    %141 = vector.extract_strided_slice %130 {offsets = [0, 16], sizes = [8, 8], strides = [1, 1]} : vector<8x32xf32> to vector<8x8xf32>
    %cst_38 = arith.constant dense<0.000000e+00> : vector<8x8xf32>
    %142 = tpu.matmul %140, %141, %cst_38 {dimension_numbers = #tpu.dot_dimension_numbers<[1], [0], [0], [1], [0, 0, 1, 1], [], []>} : vector<8x8xf32>, vector<8x8xf32>, vector<8x8xf32> -> vector<8x8xf32>
    %143 = vector.extract_strided_slice %110 {offsets = [1, 3, 0, 0], sizes = [1, 1, 8, 8], strides = [1, 1, 1, 1]} : vector<2x4x8x8xf32> to vector<1x1x8x8xf32>
    %144 = vector.shape_cast %143 : vector<1x1x8x8xf32> to vector<8x8xf32>
    %145 = vector.extract_strided_slice %130 {offsets = [0, 24], sizes = [8, 8], strides = [1, 1]} : vector<8x32xf32> to vector<8x8xf32>
    %cst_39 = arith.constant dense<0.000000e+00> : vector<8x8xf32>
    %146 = tpu.matmul %144, %145, %cst_39 {dimension_numbers = #tpu.dot_dimension_numbers<[1], [0], [0], [1], [0, 0, 1, 1], [], []>} : vector<8x8xf32>, vector<8x8xf32>, vector<8x8xf32> -> vector<8x8xf32>
    %147 = tpu.concatenate %134, %138, %142, %146 in 1 : vector<8x8xf32>, vector<8x8xf32>, vector<8x8xf32>, vector<8x8xf32> -> vector<8x32xf32>
    %148 = tpu.concatenate %129, %147 in 0 : vector<8x32xf32>, vector<8x32xf32> -> vector<16x32xf32>
    %c0_40 = arith.constant 0 : index
    %c0_41 = arith.constant 0 : index
    %149 = vector.load %arg6[%c0_40, %c0_41] : memref<32x32xf32, #tpu.memory_space<vmem>>, vector<32x32xf32>
    %cst_42 = arith.constant dense<0.000000e+00> : vector<16x32xf32>
    %150 = tpu.matmul %148, %149, %cst_42 {dimension_numbers = #tpu.dot_dimension_numbers<[1], [0], [0], [1], [0, 0, 1, 1], [], []>} : vector<16x32xf32>, vector<32x32xf32>, vector<16x32xf32> -> vector<16x32xf32>
    %c0_43 = arith.constant 0 : index
    %c0_44 = arith.constant 0 : index
    %151 = vector.load %arg7[%c0_43, %c0_44] : memref<1x32xf32, #tpu.memory_space<vmem>>, vector<1x32xf32>
    %152 = vector.shape_cast %151 : vector<1x32xf32> to vector<32xf32>
    %153 = vector.shape_cast %152 : vector<32xf32> to vector<1x32xf32>
    %154 = vector.broadcast %153 : vector<1x32xf32> to vector<16x32xf32>
    %155 = arith.addf %150, %154 : vector<16x32xf32>
    %156 = arith.addf %0, %155 : vector<16x32xf32>
    %cst_45 = arith.constant dense<0.000000e+00> : vector<16xf32>
    %157 = vector.multi_reduction <add>, %156, %cst_45 [1] : vector<16x32xf32> to vector<16xf32>
    %158 = vector.shape_cast %157 : vector<16xf32> to vector<16x1xf32>
    %cst_46 = arith.constant 3.200000e+01 : f32
    %159 = vector.broadcast %cst_46 : f32 to vector<16x1xf32>
    %160 = arith.divf %158, %159 : vector<16x1xf32>
    %161 = vector.broadcast %160 : vector<16x1xf32> to vector<16x32xf32>
    %162 = arith.subf %156, %161 : vector<16x32xf32>
    %163 = arith.mulf %162, %162 : vector<16x32xf32>
    %cst_47 = arith.constant dense<0.000000e+00> : vector<16xf32>
    %164 = vector.multi_reduction <add>, %163, %cst_47 [1] : vector<16x32xf32> to vector<16xf32>
    %165 = vector.shape_cast %164 : vector<16xf32> to vector<16x1xf32>
    %cst_48 = arith.constant 3.200000e+01 : f32
    %166 = vector.broadcast %cst_48 : f32 to vector<16x1xf32>
    %167 = arith.divf %165, %166 : vector<16x1xf32>
    %168 = vector.broadcast %160 : vector<16x1xf32> to vector<16x32xf32>
    %169 = arith.subf %156, %168 : vector<16x32xf32>
    %cst_49 = arith.constant 9.99999997E-7 : f32
    %170 = vector.broadcast %cst_49 : f32 to vector<16x1xf32>
    %171 = arith.addf %167, %170 : vector<16x1xf32>
    %172 = math.rsqrt %171 : vector<16x1xf32>
    %173 = vector.broadcast %172 : vector<16x1xf32> to vector<16x32xf32>
    %174 = arith.mulf %169, %173 : vector<16x32xf32>
    %c0_50 = arith.constant 0 : index
    %c0_51 = arith.constant 0 : index
    %175 = vector.load %arg8[%c0_50, %c0_51] : memref<1x32xf32, #tpu.memory_space<vmem>>, vector<1x32xf32>
    %176 = vector.shape_cast %175 : vector<1x32xf32> to vector<32xf32>
    %177 = vector.shape_cast %176 : vector<32xf32> to vector<1x32xf32>
    %178 = vector.broadcast %177 : vector<1x32xf32> to vector<16x32xf32>
    %179 = arith.mulf %174, %178 : vector<16x32xf32>
    %c0_52 = arith.constant 0 : index
    %c0_53 = arith.constant 0 : index
    %180 = vector.load %arg9[%c0_52, %c0_53] : memref<1x32xf32, #tpu.memory_space<vmem>>, vector<1x32xf32>
    %181 = vector.shape_cast %180 : vector<1x32xf32> to vector<32xf32>
    %182 = vector.shape_cast %181 : vector<32xf32> to vector<1x32xf32>
    %183 = vector.broadcast %182 : vector<1x32xf32> to vector<16x32xf32>
    %184 = arith.addf %179, %183 : vector<16x32xf32>
    %c0_54 = arith.constant 0 : index
    %c0_55 = arith.constant 0 : index
    %185 = vector.load %arg10[%c0_54, %c0_55] : memref<32x64xf32, #tpu.memory_space<vmem>>, vector<32x64xf32>
    %cst_56 = arith.constant dense<0.000000e+00> : vector<16x64xf32>
    %186 = tpu.matmul %184, %185, %cst_56 {dimension_numbers = #tpu.dot_dimension_numbers<[1], [0], [0], [1], [0, 0, 1, 1], [], []>} : vector<16x32xf32>, vector<32x64xf32>, vector<16x64xf32> -> vector<16x64xf32>
    %c0_57 = arith.constant 0 : index
    %c0_58 = arith.constant 0 : index
    %187 = vector.load %arg11[%c0_57, %c0_58] : memref<1x64xf32, #tpu.memory_space<vmem>>, vector<1x64xf32>
    %188 = vector.shape_cast %187 : vector<1x64xf32> to vector<64xf32>
    %189 = vector.shape_cast %188 : vector<64xf32> to vector<1x64xf32>
    %190 = vector.broadcast %189 : vector<1x64xf32> to vector<16x64xf32>
    %191 = arith.addf %186, %190 : vector<16x64xf32>
    %cst_59 = arith.constant 0.000000e+00 : f32
    %192 = vector.broadcast %cst_59 : f32 to vector<16x64xf32>
    %193 = arith.maximumf %191, %192 : vector<16x64xf32>
    %c0_60 = arith.constant 0 : index
    %c0_61 = arith.constant 0 : index
    %194 = vector.load %arg12[%c0_60, %c0_61] : memref<64x32xf32, #tpu.memory_space<vmem>>, vector<64x32xf32>
    %cst_62 = arith.constant dense<0.000000e+00> : vector<16x32xf32>
    %195 = tpu.matmul %193, %194, %cst_62 {dimension_numbers = #tpu.dot_dimension_numbers<[1], [0], [0], [1], [0, 0, 1, 1], [], []>} : vector<16x64xf32>, vector<64x32xf32>, vector<16x32xf32> -> vector<16x32xf32>
    %c0_63 = arith.constant 0 : index
    %c0_64 = arith.constant 0 : index
    %196 = vector.load %arg13[%c0_63, %c0_64] : memref<1x32xf32, #tpu.memory_space<vmem>>, vector<1x32xf32>
    %197 = vector.shape_cast %196 : vector<1x32xf32> to vector<32xf32>
    %198 = vector.shape_cast %197 : vector<32xf32> to vector<1x32xf32>
    %199 = vector.broadcast %198 : vector<1x32xf32> to vector<16x32xf32>
    %200 = arith.addf %195, %199 : vector<16x32xf32>
    %201 = arith.addf %156, %200 : vector<16x32xf32>
    %c0_65 = arith.constant 0 : index
    %c0_66 = arith.constant 0 : index
    %202 = vector.load %arg14[%c0_65, %c0_66] : memref<16x32xf32, #tpu.memory_space<vmem>>, vector<16x32xf32>
    tpu.vector_store %arg14[%c0_65, %c0_66], %201 {strides = array<i32>} : memref<16x32xf32, #tpu.memory_space<vmem>>, vector<16x32xf32>,
    return
  }
}

</mosaic_0001>

<llo_original>
// kernel: tpu_custom_call.1
$region0: #{tpu_custom_call.1}
  #allocation0 [shape = 'u32[]', space=smem, size = 0x4, offset = 0x4, fixed_abs, tag = 'smem constant byte address 0x4 - core index']
  #allocation1 [shape = 'u32[144,128]{1,0:T(1,128)}', space=vmem, size = 0x12000, scoped, tag = 'internal scratch']
  %s0 = inlined_call_operand.hbm [shape: f32[16,32], index: 0, kind: input, shape index: {}]
  %s1 = inlined_call_operand.vmem [shape: s32[2], index: 1, kind: input, shape index: {}]
  %s2 = inlined_call_operand.vmem [shape: f32[1,32], index: 2, kind: input, shape index: {}]
  %s3 = inlined_call_operand.vmem [shape: f32[1,32], index: 3, kind: input, shape index: {}]
  %s4 = inlined_call_operand.vmem [shape: f32[32,96], index: 4, kind: input, shape index: {}]
  %s5 = inlined_call_operand.vmem [shape: f32[1,96], index: 5, kind: input, shape index: {}]
  %s6 = inlined_call_operand.vmem [shape: f32[32,32], index: 6, kind: input, shape index: {}]
  %s7 = inlined_call_operand.vmem [shape: f32[1,32], index: 7, kind: input, shape index: {}]
  %s8 = inlined_call_operand.vmem [shape: f32[1,32], index: 8, kind: input, shape index: {}]
  %s9 = inlined_call_operand.vmem [shape: f32[1,32], index: 9, kind: input, shape index: {}]
  %s10 = inlined_call_operand.vmem [shape: f32[32,64], index: 10, kind: input, shape index: {}]
  %s11 = inlined_call_operand.vmem [shape: f32[1,64], index: 11, kind: input, shape index: {}]
  %s12 = inlined_call_operand.vmem [shape: f32[64,32], index: 12, kind: input, shape index: {}]
  %s13 = inlined_call_operand.vmem [shape: f32[1,32], index: 13, kind: input, shape index: {}]
  %s14 = inlined_call_operand.hbm [shape: f32[16,32], index: 14, kind: output, shape index: {0}]
  %s15 = inlined_call_operand.hbm [shape: f32[2,4,8,8], index: 15, kind: output, shape index: {1}]
  %16 = xla_tuple %s14, %s15
  %s17 = sld [smem:[#allocation0]]
  $region82: #{tpu_custom_call.1} parent=0
    _
  %s19 = ssub.s32 1, %s17
  %s20 = scalar_select 0, %s19, %s17
  $region1: #{tpu_custom_call.1} parent=0
    #allocation2 [shape = 'u8[8192]{0}', space=vmem, size = 0x2000, scoped, tag = 'input window, operand 0, single buffered']
    #allocation3 [shape = 's32[1]{0}', space=sflag, size = 0x4, scoped, tag = 'scoped memory for tpu_custom_call.1']
    #allocation4 [shape = 's32[1]{0}', space=sflag, size = 0x4, scoped, tag = 'scoped memory for tpu_custom_call.1']
    #allocation5 [shape = 's32[1]{0}', space=sflag, size = 0x4, scoped, tag = 'scoped memory for tpu_custom_call.1']
    #allocation6 [shape = 'u8[512]{0}', space=smem, size = 0x200, scoped, tag = 'input window, operand 1, single buffered']
    #allocation7 [shape = 'u8[8192]{0}', space=vmem, size = 0x2000, scoped, tag = 'output window, operand 0, single buffered']
    #allocation8 [shape = 'u8[32768]{0}', space=vmem, size = 0x8000, scoped, tag = 'output window, operand 1, single buffered']
    #allocation9 [shape = 's32[1]{0}', space=sflag, size = 0x4, scoped, tag = 'scoped memory for tpu_custom_call.1']
    %21 = vsyncpa [#allocation3], 0
    %22 = vsyncpa [#allocation5], 0
    %23 = vsyncpa [#allocation4], 0
    %24 = vsyncpa [#allocation9], 0
    // Predicated region
    $region2: #{tpu_custom_call.1} parent=1 // pred_check
      _
    $region3: #{tpu_custom_call.1} parent=1 // pred_check_branch
      %26 = sbr.rel (0) target = $region5
    $region4: #{tpu_custom_call.1} parent=1 // pred_region
      %s28 = ssub.s32 256, 256
      %29 = vsyncadd [#allocation3], %s28
      %s30 = sshll.u32 [#allocation2], 4
      %s31 = int_to_ptr.vmem [resolvable:$true] %s30
      %36 = dma.hbm_to_vmem [thread:$0]  %s0, 256, %s31, [#allocation3], 128, 128, 8
    $region5: #{tpu_custom_call.1} parent=1 // pred_fallthru
      _
    // Predicated region
    $region6: #{tpu_custom_call.1} parent=1 // pred_check
      _
    $region7: #{tpu_custom_call.1} parent=1 // pred_check_branch
      %38 = sbr.rel (0) target = $region9
    $region8: #{tpu_custom_call.1} parent=1 // pred_region
      %s40 = ssub.s32 16, 16
      %41 = vsyncadd [#allocation5], %s40
      %s43 = sshll.u32 %s1, 4
      %s44 = int_to_ptr.vmem [resolvable:$true] %s43
      %46 = dma.vmem_to_smem %s44, 16, [#allocation6], [#allocation5]
    $region9: #{tpu_custom_call.1} parent=1 // pred_fallthru
      _
    // Predicated region
    $region10: #{tpu_custom_call.1} parent=1 // pred_check
      _
    $region11: #{tpu_custom_call.1} parent=1 // pred_check_branch
      %48 = sbr.rel (0) target = $region13
    $region12: #{tpu_custom_call.1} parent=1 // pred_region
      _
    $region13: #{tpu_custom_call.1} parent=1 // pred_fallthru
      _
    // Predicated region
    $region14: #{tpu_custom_call.1} parent=1 // pred_check
      _
    $region15: #{tpu_custom_call.1} parent=1 // pred_check_branch
      %50 = sbr.rel (0) target = $region17
    $region16: #{tpu_custom_call.1} parent=1 // pred_region
      _
    $region17: #{tpu_custom_call.1} parent=1 // pred_fallthru
      _
    // Predicated region
    $region18: #{tpu_custom_call.1} parent=1 // pred_check
      _
    $region19: #{tpu_custom_call.1} parent=1 // pred_check_branch
      %52 = sbr.rel (0) target = $region21
    $region20: #{tpu_custom_call.1} parent=1 // pred_region
      _
    $region21: #{tpu_custom_call.1} parent=1 // pred_fallthru
      _
    // Predicated region
    $region22: #{tpu_custom_call.1} parent=1 // pred_check
      _
    $region23: #{tpu_custom_call.1} parent=1 // pred_check_branch
      %54 = sbr.rel (0) target = $region25
    $region24: #{tpu_custom_call.1} parent=1 // pred_region
      _
    $region25: #{tpu_custom_call.1} parent=1 // pred_fallthru
      _
    // Predicated region
    $region26: #{tpu_custom_call.1} parent=1 // pred_check
      _
    $region27: #{tpu_custom_call.1} parent=1 // pred_check_branch
      %56 = sbr.rel (0) target = $region29
    $region28: #{tpu_custom_call.1} parent=1 // pred_region
      _
    $region29: #{tpu_custom_call.1} parent=1 // pred_fallthru
      _
    // Predicated region
    $region30: #{tpu_custom_call.1} parent=1 // pred_check
      _
    $region31: #{tpu_custom_call.1} parent=1 // pred_check_branch
      %58 = sbr.rel (0) target = $region33
    $region32: #{tpu_custom_call.1} parent=1 // pred_region
      _
    $region33: #{tpu_custom_call.1} parent=1 // pred_fallthru
      _
    // Predicated region
    $region34: #{tpu_custom_call.1} parent=1 // pred_check
      _
    $region35: #{tpu_custom_call.1} parent=1 // pred_check_branch
      %60 = sbr.rel (0) target = $region37
    $region36: #{tpu_custom_call.1} parent=1 // pred_region
      _
    $region37: #{tpu_custom_call.1} parent=1 // pred_fallthru
      _
    // Predicated region
    $region38: #{tpu_custom_call.1} parent=1 // pred_check
      _
    $region39: #{tpu_custom_call.1} parent=1 // pred_check_branch
      %62 = sbr.rel (0) target = $region41
    $region40: #{tpu_custom_call.1} parent=1 // pred_region
      _
    $region41: #{tpu_custom_call.1} parent=1 // pred_fallthru
      _
    // Predicated region
    $region42: #{tpu_custom_call.1} parent=1 // pred_check
      _
    $region43: #{tpu_custom_call.1} parent=1 // pred_check_branch
      %64 = sbr.rel (0) target = $region45
    $region44: #{tpu_custom_call.1} parent=1 // pred_region
      _
    $region45: #{tpu_custom_call.1} parent=1 // pred_fallthru
      _
    // Predicated region
    $region46: #{tpu_custom_call.1} parent=1 // pred_check
      _
    $region47: #{tpu_custom_call.1} parent=1 // pred_check_branch
      %66 = sbr.rel (0) target = $region49
    $region48: #{tpu_custom_call.1} parent=1 // pred_region
      _
    $region49: #{tpu_custom_call.1} parent=1 // pred_fallthru
      _
    // Predicated region
    $region50: #{tpu_custom_call.1} parent=1 // pred_check
      _
    $region51: #{tpu_custom_call.1} parent=1 // pred_check_branch
      %68 = sbr.rel (0) target = $region53
    $region52: #{tpu_custom_call.1} parent=1 // pred_region
      _
    $region53: #{tpu_custom_call.1} parent=1 // pred_fallthru
      _
    // Predicated region
    $region54: #{tpu_custom_call.1} parent=1 // pred_check
      _
    $region55: #{tpu_custom_call.1} parent=1 // pred_check_branch
      %70 = sbr.rel (0) target = $region57
    $region56: #{tpu_custom_call.1} parent=1 // pred_region
      _
    $region57: #{tpu_custom_call.1} parent=1 // pred_fallthru
      _
    // Predicated region
    $region58: #{tpu_custom_call.1} parent=1 // pred_check
      _
    $region59: #{tpu_custom_call.1} parent=1 // pred_check_branch
      %72 = sbr.rel (0) target = $region61
    $region60: #{tpu_custom_call.1} parent=1 // pred_region
      %73 = dma.done [#allocation3], 256
    $region61: #{tpu_custom_call.1} parent=1 // pred_fallthru
      _
    // Predicated region
    $region62: #{tpu_custom_call.1} parent=1 // pred_check
      _
    $region63: #{tpu_custom_call.1} parent=1 // pred_check_branch
      %75 = sbr.rel (0) target = $region65
    $region64: #{tpu_custom_call.1} parent=1 // pred_region
      %76 = dma.done [#allocation5], 16
    $region65: #{tpu_custom_call.1} parent=1 // pred_fallthru
      _
    %77 = sfence
    %v78 = vld [vmem:[#allocation2] sm:$0xff]
    %v79 = vld [vmem:[#allocation2 + $0x8] sm:$0xff]
    %vm80 = vcmask 261120
    %v81 = vsel %vm80, %v78, 0.0
    %82 = vadd.xlane.f32.xlu0 %v81
    %v83 = vpop.xlane.xlu0 %82
    %v84 = vsel %vm80, %v79, 0.0
    %85 = vadd.xlane.f32.xlu0 %v84
    %v86 = vpop.xlane.xlu0 %85
    %v87 = vrcp.pop 32.0
    %v88 = vmul.f32 %v83, %v87
    %v89 = vmul.f32 %v86, %v87
    %v90 = vsub.f32 %v78, %v88
    %v91 = vsub.f32 %v79, %v89
    %v92 = vmul.f32 %v90, %v90
    %v93 = vmul.f32 %v91, %v91
    %v94 = vsel %vm80, %v92, 0.0
    %95 = vadd.xlane.f32.xlu0 %v94
    %v96 = vpop.xlane.xlu0 %95
    %v97 = vsel %vm80, %v93, 0.0
    %98 = vadd.xlane.f32.xlu0 %v97
    %v99 = vpop.xlane.xlu0 %98
    %v100 = vmul.f32 %v96, %v87
    %v101 = vmul.f32 %v99, %v87
    %v102 = vadd.f32 %v100, 1e-06
    %v103 = vadd.f32 %v101, 1e-06
    %v104 = vrsqrt.pop %v102
    %v105 = vrsqrt.pop %v103
    %v106 = vmul.f32 %v90, %v104
    %v107 = vmul.f32 %v91, %v105
    %v108 = vld [vmem:[%s2] sm:$0x1]
    %v110 = vlaneseq
    %v111 = vshrl.u32 %v110, 7
    %v112 = vsub.s32 0, %v111
    %v113 = vrot.slane %v108, %v112
    %v115 = vmul.f32 %v106, %v113
    %v116 = vmul.f32 %v107, %v113
    %v117 = vld [vmem:[%s3] sm:$0x1]
    %v119 = vlaneseq
    %v120 = vshrl.u32 %v119, 7
    %v121 = vsub.s32 0, %v120
    %v122 = vrot.slane %v117, %v121
    %v124 = vadd.f32 %v115, %v122
    %v125 = vadd.f32 %v116, %v122
    %v126 = vld [vmem:[%s4] sm:$0xff]
    %v127 = vld [vmem:[%s4 + $0x8] sm:$0xff]
    %v128 = vld [vmem:[%s4 + $0x10] sm:$0xff]
    %v129 = vld [vmem:[%s4 + $0x18] sm:$0xff]
    %v130 = vld [vmem:[%s5] sm:$0x1]
    %v132 = vlaneseq
    %v133 = vshrl.u32 %v132, 7
    %v134 = vsub.s32 0, %v133
    %v135 = vrot.slane %v130, %v134
    %v138 = vsel %vm80, %v124, 0
    %v141 = vsel %vm80, %v125, 0
    %143 = vmatprep.subr.mxu0 0.0
    %144 = vmatpush1.msra.mxu0 %v126
    %145 = vmatprep.subr.mxu0 0.0
    %146 = vmatpush1.msra.mxu0 %v127
    %147 = vmatprep.subr.mxu0 0.0
    %148 = vmatpush1.msra.mxu0 %v128
    %149 = vmatprep.subr.mxu0 0.0
    %150 = vmatpush1.msra.mxu0 %v129
    %151 = vmatprep.subr.mxu0 0.0
    %152 = vmatpush1.msra.mxu0 0.0
    %153 = vmatprep.subr.mxu0 0.0
    %154 = vmatpush1.msra.mxu0 0.0
    %155 = vmatprep.subr.mxu0 0.0
    %156 = vmatpush1.msra.mxu0 0.0
    %157 = vmatprep.subr.mxu0 0.0
    %158 = vmatpush1.msra.mxu0 0.0
    %159 = vmatprep.subr.mxu0 0.0
    %160 = vmatpush1.msra.mxu0 0.0
    %161 = vmatprep.subr.mxu0 0.0
    %162 = vmatpush1.msra.mxu0 0.0
    %163 = vmatprep.subr.mxu0 0.0
    %164 = vmatpush1.msra.mxu0 0.0
    %165 = vmatprep.subr.mxu0 0.0
    %166 = vmatpush1.msra.mxu0 0.0
    %167 = vmatprep.subr.mxu0 0.0
    %168 = vmatpush1.msra.mxu0 0.0
    %169 = vmatprep.subr.mxu0 0.0
    %170 = vmatpush1.msra.mxu0 0.0
    %171 = vmatprep.subr.mxu0 0.0
    %172 = vmatpush1.msra.mxu0 0.0
    %173 = vmatprep.subr.mxu0 0.0
    %174 = vmatpush1.msra.mxu0 0.0
    %175 = vmatprep.subr.mxu0 0.0
    %176 = vmatpush1.msra.mxu0 0.0
    %177 = vmatprep.subr.mxu0 0.0
    %178 = vmatpush1.msra.mxu0 0.0
    %179 = vmatprep.subr.mxu0 0.0
    %180 = vmatpush1.msra.mxu0 0.0
    %181 = vmatprep.subr.mxu0 0.0
    %182 = vmatpush1.msra.mxu0 0.0
    %183 = vmatprep.subr.mxu0 0.0
    %184 = vmatpush1.msra.mxu0 0.0
    %185 = vmatprep.subr.mxu0 0.0
    %186 = vmatpush1.msra.mxu0 0.0
    %187 = vmatprep.subr.mxu0 0.0
    %188 = vmatpush1.msra.mxu0 0.0
    %189 = vmatprep.subr.mxu0 0.0
    %190 = vmatpush1.msra.mxu0 0.0
    %191 = vmatprep.subr.mxu0 0.0
    %192 = vmatpush1.msra.mxu0 0.0
    %193 = vmatprep.subr.mxu0 0.0
    %194 = vmatpush1.msra.mxu0 0.0
    %195 = vmatprep.subr.mxu0 0.0
    %196 = vmatpush1.msra.mxu0 0.0
    %197 = vmatprep.subr.mxu0 0.0
    %198 = vmatpush1.msra.mxu0 0.0
    %199 = vmatprep.subr.mxu0 0.0
    %200 = vmatpush1.msra.mxu0 0.0
    %201 = vmatprep.subr.mxu0 0.0
    %202 = vmatpush1.msra.mxu0 0.0
    %203 = vmatprep.subr.mxu0 0.0
    %204 = vmatpush1.msra.mxu0 0.0
    %205 = vmatprep.subr.mxu0 0.0
    %206 = vmatpush1.msra.mxu0 0.0
    %207 = vmatprep.mubr.f32.mxu0 0.0
    %208 = vmatmul.mubr.f32.gmra.mrb[0].mxu0 %v138
    %v209 = vpop.f32.mrb[0].mxu0
    %v210 = vadd.f32 %v135, %v209
    %v211 = vpop.f32.mrb[0].mxu0
    %212 = vmatprep.mubr.f32.mxu0 0.0
    %213 = vmatmul.mubr.f32.gmra.mrb[0].mxu0 %v141
    %v214 = vpop.f32.mrb[0].mxu0
    %v215 = vadd.f32 %v135, %v214
    %v216 = vpop.f32.mrb[0].mxu0
    %217 = vdwg.mxu0
    %v218 = vlaneseq
    %v219 = vand.u32 %v218, 127
    %s220 = sld [smem:[#allocation6]]
    %v221 = vstv %s220
    %vm222 = vcmp.lt.s32.totalorder %v219, %v221
    %224 = vrot.lane.b32.xlu0 %v210, 96
    %v225 = vpop.permute.xlu0 %224
    %vm226 = vcmask 64512
    %v227 = vsel %vm226, %v210, 0
    %v229 = vsel %vm226, %v225, 0
    %231 = vmatprep.subr.mxu0 0.0
    %232 = vmatpush1.xpose.msra.mxu0 %v229
    %233 = vmatprep.subr.mxu0 0.0
    %234 = vmatpush1.xpose.msra.mxu0 0.0
    %235 = vmatprep.subr.mxu0 0.0
    %236 = vmatpush1.xpose.msra.mxu0 0.0
    %237 = vmatprep.subr.mxu0 0.0
    %238 = vmatpush1.xpose.msra.mxu0 0.0
    %239 = vmatprep.subr.mxu0 0.0
    %240 = vmatpush1.xpose.msra.mxu0 0.0
    %241 = vmatprep.subr.mxu0 0.0
    %242 = vmatpush1.xpose.msra.mxu0 0.0
    %243 = vmatprep.subr.mxu0 0.0
    %244 = vmatpush1.xpose.msra.mxu0 0.0
    %245 = vmatprep.subr.mxu0 0.0
    %246 = vmatpush1.xpose.msra.mxu0 0.0
    %247 = vmatprep.subr.mxu0 0.0
    %248 = vmatpush1.xpose.msra.mxu0 0.0
    %249 = vmatprep.subr.mxu0 0.0
    %250 = vmatpush1.xpose.msra.mxu0 0.0
    %251 = vmatprep.subr.mxu0 0.0
    %252 = vmatpush1.xpose.msra.mxu0 0.0
    %253 = vmatprep.subr.mxu0 0.0
    %254 = vmatpush1.xpose.msra.mxu0 0.0
    %255 = vmatprep.subr.mxu0 0.0
    %256 = vmatpush1.xpose.msra.mxu0 0.0
    %257 = vmatprep.subr.mxu0 0.0
    %258 = vmatpush1.xpose.msra.mxu0 0.0
    %259 = vmatprep.subr.mxu0 0.0
    %260 = vmatpush1.xpose.msra.mxu0 0.0
    %261 = vmatprep.subr.mxu0 0.0
    %262 = vmatpush1.xpose.msra.mxu0 0.0
    %263 = vmatprep.subr.mxu0 0.0
    %264 = vmatpush1.xpose.msra.mxu0 0.0
    %265 = vmatprep.subr.mxu0 0.0
    %266 = vmatpush1.xpose.msra.mxu0 0.0
    %267 = vmatprep.subr.mxu0 0.0
    %268 = vmatpush1.xpose.msra.mxu0 0.0
    %269 = vmatprep.subr.mxu0 0.0
    %270 = vmatpush1.xpose.msra.mxu0 0.0
    %271 = vmatprep.subr.mxu0 0.0
    %272 = vmatpush1.xpose.msra.mxu0 0.0
    %273 = vmatprep.subr.mxu0 0.0
    %274 = vmatpush1.xpose.msra.mxu0 0.0
    %275 = vmatprep.subr.mxu0 0.0
    %276 = vmatpush1.xpose.msra.mxu0 0.0
    %277 = vmatprep.subr.mxu0 0.0
    %278 = vmatpush1.xpose.msra.mxu0 0.0
    %279 = vmatprep.subr.mxu0 0.0
    %280 = vmatpush1.xpose.msra.mxu0 0.0
    %281 = vmatprep.subr.mxu0 0.0
    %282 = vmatpush1.xpose.msra.mxu0 0.0
    %283 = vmatprep.subr.mxu0 0.0
    %284 = vmatpush1.xpose.msra.mxu0 0.0
    %285 = vmatprep.subr.mxu0 0.0
    %286 = vmatpush1.xpose.msra.mxu0 0.0
    %287 = vmatprep.subr.mxu0 0.0
    %288 = vmatpush1.xpose.msra.mxu0 0.0
    %289 = vmatprep.subr.mxu0 0.0
    %290 = vmatpush1.xpose.msra.mxu0 0.0
    %291 = vmatprep.subr.mxu0 0.0
    %292 = vmatpush1.xpose.msra.mxu0 0.0
    %293 = vmatprep.subr.mxu0 0.0
    %294 = vmatpush1.xpose.msra.mxu0 0.0
    %295 = vmatprep.mubr.f32.mxu0 0.0
    %296 = vmatmul.mubr.f32.gmra.mrb[0].mxu0 %v227
    %v297 = vpop.f32.mrb[0].mxu0
    %v298 = vadd.f32 0.0, %v297
    %v299 = vpop.f32.mrb[0].mxu0
    %300 = vdwg.mxu0
    %301 = vrot.lane.b32.xlu0 %v210, 120
    %v302 = vpop.permute.xlu0 %301
    %303 = vrot.lane.b32.xlu0 %v210, 88
    %v304 = vpop.permute.xlu0 %303
    %v305 = vsel %vm226, %v302, 0
    %v307 = vsel %vm226, %v304, 0
    %309 = vmatprep.subr.mxu0 0.0
    %310 = vmatpush1.xpose.msra.mxu0 %v307
    %311 = vmatprep.subr.mxu0 0.0
    %312 = vmatpush1.xpose.msra.mxu0 0.0
    %313 = vmatprep.subr.mxu0 0.0
    %314 = vmatpush1.xpose.msra.mxu0 0.0
    %315 = vmatprep.subr.mxu0 0.0
    %316 = vmatpush1.xpose.msra.mxu0 0.0
    %317 = vmatprep.subr.mxu0 0.0
    %318 = vmatpush1.xpose.msra.mxu0 0.0
    %319 = vmatprep.subr.mxu0 0.0
    %320 = vmatpush1.xpose.msra.mxu0 0.0
    %321 = vmatprep.subr.mxu0 0.0
    %322 = vmatpush1.xpose.msra.mxu0 0.0
    %323 = vmatprep.subr.mxu0 0.0
    %324 = vmatpush1.xpose.msra.mxu0 0.0
    %325 = vmatprep.subr.mxu0 0.0
    %326 = vmatpush1.xpose.msra.mxu0 0.0
    %327 = vmatprep.subr.mxu0 0.0
    %328 = vmatpush1.xpose.msra.mxu0 0.0
    %329 = vmatprep.subr.mxu0 0.0
    %330 = vmatpush1.xpose.msra.mxu0 0.0
    %331 = vmatprep.subr.mxu0 0.0
    %332 = vmatpush1.xpose.msra.mxu0 0.0
    %333 = vmatprep.subr.mxu0 0.0
    %334 = vmatpush1.xpose.msra.mxu0 0.0
    %335 = vmatprep.subr.mxu0 0.0
    %336 = vmatpush1.xpose.msra.mxu0 0.0
    %337 = vmatprep.subr.mxu0 0.0
    %338 = vmatpush1.xpose.msra.mxu0 0.0
    %339 = vmatprep.subr.mxu0 0.0
    %340 = vmatpush1.xpose.msra.mxu0 0.0
    %341 = vmatprep.subr.mxu0 0.0
    %342 = vmatpush1.xpose.msra.mxu0 0.0
    %343 = vmatprep.subr.mxu0 0.0
    %344 = vmatpush1.xpose.msra.mxu0 0.0
    %345 = vmatprep.subr.mxu0 0.0
    %346 = vmatpush1.xpose.msra.mxu0 0.0
    %347 = vmatprep.subr.mxu0 0.0
    %348 = vmatpush1.xpose.msra.mxu0 0.0
    %349 = vmatprep.subr.mxu0 0.0
    %350 = vmatpush1.xpose.msra.mxu0 0.0
    %351 = vmatprep.subr.mxu0 0.0
    %352 = vmatpush1.xpose.msra.mxu0 0.0
    %353 = vmatprep.subr.mxu0 0.0
    %354 = vmatpush1.xpose.msra.mxu0 0.0
    %355 = vmatprep.subr.mxu0 0.0
    %356 = vmatpush1.xpose.msra.mxu0 0.0
    %357 = vmatprep.subr.mxu0 0.0
    %358 = vmatpush1.xpose.msra.mxu0 0.0
    %359 = vmatprep.subr.mxu0 0.0
    %360 = vmatpush1.xpose.msra.mxu0 0.0
    %361 = vmatprep.subr.mxu0 0.0
    %362 = vmatpush1.xpose.msra.mxu0 0.0
    %363 = vmatprep.subr.mxu0 0.0
    %364 = vmatpush1.xpose.msra.mxu0 0.0
    %365 = vmatprep.subr.mxu0 0.0
    %366 = vmatpush1.xpose.msra.mxu0 0.0
    %367 = vmatprep.subr.mxu0 0.0
    %368 = vmatpush1.xpose.msra.mxu0 0.0
    %369 = vmatprep.subr.mxu0 0.0
    %370 = vmatpush1.xpose.msra.mxu0 0.0
    %371 = vmatprep.subr.mxu0 0.0
    %372 = vmatpush1.xpose.msra.mxu0 0.0
    %373 = vmatprep.mubr.f32.mxu0 0.0
    %374 = vmatmul.mubr.f32.gmra.mrb[0].mxu0 %v305
    %v375 = vpop.f32.mrb[0].mxu0
    %v376 = vadd.f32 0.0, %v375
    %v377 = vpop.f32.mrb[0].mxu0
    %378 = vdwg.mxu0
    %379 = vrot.lane.b32.xlu0 %v210, 112
    %v380 = vpop.permute.xlu0 %379
    %381 = vrot.lane.b32.xlu0 %v210, 80
    %v382 = vpop.permute.xlu0 %381
    %v383 = vsel %vm226, %v380, 0
    %v385 = vsel %vm226, %v382, 0
    %387 = vmatprep.subr.mxu0 0.0
    %388 = vmatpush1.xpose.msra.mxu0 %v385
    %389 = vmatprep.subr.mxu0 0.0
    %390 = vmatpush1.xpose.msra.mxu0 0.0
    %391 = vmatprep.subr.mxu0 0.0
    %392 = vmatpush1.xpose.msra.mxu0 0.0
    %393 = vmatprep.subr.mxu0 0.0
    %394 = vmatpush1.xpose.msra.mxu0 0.0
    %395 = vmatprep.subr.mxu0 0.0
    %396 = vmatpush1.xpose.msra.mxu0 0.0
    %397 = vmatprep.subr.mxu0 0.0
    %398 = vmatpush1.xpose.msra.mxu0 0.0
    %399 = vmatprep.subr.mxu0 0.0
    %400 = vmatpush1.xpose.msra.mxu0 0.0
    %401 = vmatprep.subr.mxu0 0.0
    %402 = vmatpush1.xpose.msra.mxu0 0.0
    %403 = vmatprep.subr.mxu0 0.0
    %404 = vmatpush1.xpose.msra.mxu0 0.0
    %405 = vmatprep.subr.mxu0 0.0
    %406 = vmatpush1.xpose.msra.mxu0 0.0
    %407 = vmatprep.subr.mxu0 0.0
    %408 = vmatpush1.xpose.msra.mxu0 0.0
    %409 = vmatprep.subr.mxu0 0.0
    %410 = vmatpush1.xpose.msra.mxu0 0.0
    %411 = vmatprep.subr.mxu0 0.0
    %412 = vmatpush1.xpose.msra.mxu0 0.0
    %413 = vmatprep.subr.mxu0 0.0
    %414 = vmatpush1.xpose.msra.mxu0 0.0
    %415 = vmatprep.subr.mxu0 0.0
    %416 = vmatpush1.xpose.msra.mxu0 0.0
    %417 = vmatprep.subr.mxu0 0.0
    %418 = vmatpush1.xpose.msra.mxu0 0.0
    %419 = vmatprep.subr.mxu0 0.0
    %420 = vmatpush1.xpose.msra.mxu0 0.0
    %421 = vmatprep.subr.mxu0 0.0
    %422 = vmatpush1.xpose.msra.mxu0 0.0
    %423 = vmatprep.subr.mxu0 0.0
    %424 = vmatpush1.xpose.msra.mxu0 0.0
    %425 = vmatprep.subr.mxu0 0.0
    %426 = vmatpush1.xpose.msra.mxu0 0.0
    %427 = vmatprep.subr.mxu0 0.0
    %428 = vmatpush1.xpose.msra.mxu0 0.0
    %429 = vmatprep.subr.mxu0 0.0
    %430 = vmatpush1.xpose.msra.mxu0 0.0
    %431 = vmatprep.subr.mxu0 0.0
    %432 = vmatpush1.xpose.msra.mxu0 0.0
    %433 = vmatprep.subr.mxu0 0.0
    %434 = vmatpush1.xpose.msra.mxu0 0.0
    %435 = vmatprep.subr.mxu0 0.0
    %436 = vmatpush1.xpose.msra.mxu0 0.0
    %437 = vmatprep.subr.mxu0 0.0
    %438 = vmatpush1.xpose.msra.mxu0 0.0
    %439 = vmatprep.subr.mxu0 0.0
    %440 = vmatpush1.xpose.msra.mxu0 0.0
    %441 = vmatprep.subr.mxu0 0.0
    %442 = vmatpush1.xpose.msra.mxu0 0.0
    %443 = vmatprep.subr.mxu0 0.0
    %444 = vmatpush1.xpose.msra.mxu0 0.0
    %445 = vmatprep.subr.mxu0 0.0
    %446 = vmatpush1.xpose.msra.mxu0 0.0
    %447 = vmatprep.subr.mxu0 0.0
    %448 = vmatpush1.xpose.msra.mxu0 0.0
    %449 = vmatprep.subr.mxu0 0.0
    %450 = vmatpush1.xpose.msra.mxu0 0.0
    %451 = vmatprep.mubr.f32.mxu0 0.0
    %452 = vmatmul.mubr.f32.gmra.mrb[0].mxu0 %v383
    %v453 = vpop.f32.mrb[0].mxu0
    %v454 = vadd.f32 0.0, %v453
    %v455 = vpop.f32.mrb[0].mxu0
    %456 = vdwg.mxu0
    %457 = vrot.lane.b32.xlu0 %v210, 104
    %v458 = vpop.permute.xlu0 %457
    %459 = vrot.lane.b32.xlu0 %v210, 72
    %v460 = vpop.permute.xlu0 %459
    %v461 = vsel %vm226, %v458, 0
    %v463 = vsel %vm226, %v460, 0
    %465 = vmatprep.subr.mxu0 0.0
    %466 = vmatpush1.xpose.msra.mxu0 %v463
    %467 = vmatprep.subr.mxu0 0.0
    %468 = vmatpush1.xpose.msra.mxu0 0.0
    %469 = vmatprep.subr.mxu0 0.0
    %470 = vmatpush1.xpose.msra.mxu0 0.0
    %471 = vmatprep.subr.mxu0 0.0
    %472 = vmatpush1.xpose.msra.mxu0 0.0
    %473 = vmatprep.subr.mxu0 0.0
    %474 = vmatpush1.xpose.msra.mxu0 0.0
    %475 = vmatprep.subr.mxu0 0.0
    %476 = vmatpush1.xpose.msra.mxu0 0.0
    %477 = vmatprep.subr.mxu0 0.0
    %478 = vmatpush1.xpose.msra.mxu0 0.0
    %479 = vmatprep.subr.mxu0 0.0
    %480 = vmatpush1.xpose.msra.mxu0 0.0
    %481 = vmatprep.subr.mxu0 0.0
    %482 = vmatpush1.xpose.msra.mxu0 0.0
    %483 = vmatprep.subr.mxu0 0.0
    %484 = vmatpush1.xpose.msra.mxu0 0.0
    %485 = vmatprep.subr.mxu0 0.0
    %486 = vmatpush1.xpose.msra.mxu0 0.0
    %487 = vmatprep.subr.mxu0 0.0
    %488 = vmatpush1.xpose.msra.mxu0 0.0
    %489 = vmatprep.subr.mxu0 0.0
    %490 = vmatpush1.xpose.msra.mxu0 0.0
    %491 = vmatprep.subr.mxu0 0.0
    %492 = vmatpush1.xpose.msra.mxu0 0.0
    %493 = vmatprep.subr.mxu0 0.0
    %494 = vmatpush1.xpose.msra.mxu0 0.0
    %495 = vmatprep.subr.mxu0 0.0
    %496 = vmatpush1.xpose.msra.mxu0 0.0
    %497 = vmatprep.subr.mxu0 0.0
    %498 = vmatpush1.xpose.msra.mxu0 0.0
    %499 = vmatprep.subr.mxu0 0.0
    %500 = vmatpush1.xpose.msra.mxu0 0.0
    %501 = vmatprep.subr.mxu0 0.0
    %502 = vmatpush1.xpose.msra.mxu0 0.0
    %503 = vmatprep.subr.mxu0 0.0
    %504 = vmatpush1.xpose.msra.mxu0 0.0
    %505 = vmatprep.subr.mxu0 0.0
    %506 = vmatpush1.xpose.msra.mxu0 0.0
    %507 = vmatprep.subr.mxu0 0.0
    %508 = vmatpush1.xpose.msra.mxu0 0.0
    %509 = vmatprep.subr.mxu0 0.0
    %510 = vmatpush1.xpose.msra.mxu0 0.0
    %511 = vmatprep.subr.mxu0 0.0
    %512 = vmatpush1.xpose.msra.mxu0 0.0
    %513 = vmatprep.subr.mxu0 0.0
    %514 = vmatpush1.xpose.msra.mxu0 0.0
    %515 = vmatprep.subr.mxu0 0.0
    %516 = vmatpush1.xpose.msra.mxu0 0.0
    %517 = vmatprep.subr.mxu0 0.0
    %518 = vmatpush1.xpose.msra.mxu0 0.0
    %519 = vmatprep.subr.mxu0 0.0
    %520 = vmatpush1.xpose.msra.mxu0 0.0
    %521 = vmatprep.subr.mxu0 0.0
    %522 = vmatpush1.xpose.msra.mxu0 0.0
    %523 = vmatprep.subr.mxu0 0.0
    %524 = vmatpush1.xpose.msra.mxu0 0.0
    %525 = vmatprep.subr.mxu0 0.0
    %526 = vmatpush1.xpose.msra.mxu0 0.0
    %527 = vmatprep.subr.mxu0 0.0
    %528 = vmatpush1.xpose.msra.mxu0 0.0
    %529 = vmatprep.mubr.f32.mxu0 0.0
    %530 = vmatmul.mubr.f32.gmra.mrb[0].mxu0 %v461
    %v531 = vpop.f32.mrb[0].mxu0
    %v532 = vadd.f32 0.0, %v531
    %v533 = vpop.f32.mrb[0].mxu0
    %534 = vdwg.mxu0
    %v535 = vsel %vm222, 1, 0
    %vm536 = vcmp.eq.s32.totalorder %v535, 1
    %v537 = vsel %vm536, %v298, -1e+30
    %v538 = vsel %vm536, %v376, -1e+30
    %v539 = vsel %vm536, %v454, -1e+30
    %v540 = vsel %vm536, %v532, -1e+30
    %s541 = sld [smem:[#allocation6 + $0x1]]
    %v542 = vstv %s541
    %vm543 = vcmp.lt.s32.totalorder %v219, %v542
    %545 = vrot.lane.b32.xlu0 %v215, 96
    %v546 = vpop.permute.xlu0 %545
    %v547 = vsel %vm226, %v215, 0
    %v549 = vsel %vm226, %v546, 0
    %551 = vmatprep.subr.mxu0 0.0
    %552 = vmatpush1.xpose.msra.mxu0 %v549
    %553 = vmatprep.subr.mxu0 0.0
    %554 = vmatpush1.xpose.msra.mxu0 0.0
    %555 = vmatprep.subr.mxu0 0.0
    %556 = vmatpush1.xpose.msra.mxu0 0.0
    %557 = vmatprep.subr.mxu0 0.0
    %558 = vmatpush1.xpose.msra.mxu0 0.0
    %559 = vmatprep.subr.mxu0 0.0
    %560 = vmatpush1.xpose.msra.mxu0 0.0
    %561 = vmatprep.subr.mxu0 0.0
    %562 = vmatpush1.xpose.msra.mxu0 0.0
    %563 = vmatprep.subr.mxu0 0.0
    %564 = vmatpush1.xpose.msra.mxu0 0.0
    %565 = vmatprep.subr.mxu0 0.0
    %566 = vmatpush1.xpose.msra.mxu0 0.0
    %567 = vmatprep.subr.mxu0 0.0
    %568 = vmatpush1.xpose.msra.mxu0 0.0
    %569 = vmatprep.subr.mxu0 0.0
    %570 = vmatpush1.xpose.msra.mxu0 0.0
    %571 = vmatprep.subr.mxu0 0.0
    %572 = vmatpush1.xpose.msra.mxu0 0.0
    %573 = vmatprep.subr.mxu0 0.0
    %574 = vmatpush1.xpose.msra.mxu0 0.0
    %575 = vmatprep.subr.mxu0 0.0
    %576 = vmatpush1.xpose.msra.mxu0 0.0
    %577 = vmatprep.subr.mxu0 0.0
    %578 = vmatpush1.xpose.msra.mxu0 0.0
    %579 = vmatprep.subr.mxu0 0.0
    %580 = vmatpush1.xpose.msra.mxu0 0.0
    %581 = vmatprep.subr.mxu0 0.0
    %582 = vmatpush1.xpose.msra.mxu0 0.0
    %583 = vmatprep.subr.mxu0 0.0
    %584 = vmatpush1.xpose.msra.mxu0 0.0
    %585 = vmatprep.subr.mxu0 0.0
    %586 = vmatpush1.xpose.msra.mxu0 0.0
    %587 = vmatprep.subr.mxu0 0.0
    %588 = vmatpush1.xpose.msra.mxu0 0.0
    %589 = vmatprep.subr.mxu0 0.0
    %590 = vmatpush1.xpose.msra.mxu0 0.0
    %591 = vmatprep.subr.mxu0 0.0
    %592 = vmatpush1.xpose.msra.mxu0 0.0
    %593 = vmatprep.subr.mxu0 0.0
    %594 = vmatpush1.xpose.msra.mxu0 0.0
    %595 = vmatprep.subr.mxu0 0.0
    %596 = vmatpush1.xpose.msra.mxu0 0.0
    %597 = vmatprep.subr.mxu0 0.0
    %598 = vmatpush1.xpose.msra.mxu0 0.0
    %599 = vmatprep.subr.mxu0 0.0
    %600 = vmatpush1.xpose.msra.mxu0 0.0
    %601 = vmatprep.subr.mxu0 0.0
    %602 = vmatpush1.xpose.msra.mxu0 0.0
    %603 = vmatprep.subr.mxu0 0.0
    %604 = vmatpush1.xpose.msra.mxu0 0.0
    %605 = vmatprep.subr.mxu0 0.0
    %606 = vmatpush1.xpose.msra.mxu0 0.0
    %607 = vmatprep.subr.mxu0 0.0
    %608 = vmatpush1.xpose.msra.mxu0 0.0
    %609 = vmatprep.subr.mxu0 0.0
    %610 = vmatpush1.xpose.msra.mxu0 0.0
    %611 = vmatprep.subr.mxu0 0.0
    %612 = vmatpush1.xpose.msra.mxu0 0.0
    %613 = vmatprep.subr.mxu0 0.0
    %614 = vmatpush1.xpose.msra.mxu0 0.0
    %615 = vmatprep.mubr.f32.mxu0 0.0
    %616 = vmatmul.mubr.f32.gmra.mrb[0].mxu0 %v547
    %v617 = vpop.f32.mrb[0].mxu0
    %v618 = vadd.f32 0.0, %v617
    %v619 = vpop.f32.mrb[0].mxu0
    %620 = vdwg.mxu0
    %621 = vrot.lane.b32.xlu0 %v215, 120
    %v622 = vpop.permute.xlu0 %621
    %623 = vrot.lane.b32.xlu0 %v215, 88
    %v624 = vpop.permute.xlu0 %623
    %v625 = vsel %vm226, %v622, 0
    %v627 = vsel %vm226, %v624, 0
    %629 = vmatprep.subr.mxu0 0.0
    %630 = vmatpush1.xpose.msra.mxu0 %v627
    %631 = vmatprep.subr.mxu0 0.0
    %632 = vmatpush1.xpose.msra.mxu0 0.0
    %633 = vmatprep.subr.mxu0 0.0
    %634 = vmatpush1.xpose.msra.mxu0 0.0
    %635 = vmatprep.subr.mxu0 0.0
    %636 = vmatpush1.xpose.msra.mxu0 0.0
    %637 = vmatprep.subr.mxu0 0.0
    %638 = vmatpush1.xpose.msra.mxu0 0.0
    %639 = vmatprep.subr.mxu0 0.0
    %640 = vmatpush1.xpose.msra.mxu0 0.0
    %641 = vmatprep.subr.mxu0 0.0
    %642 = vmatpush1.xpose.msra.mxu0 0.0
    %643 = vmatprep.subr.mxu0 0.0
    %644 = vmatpush1.xpose.msra.mxu0 0.0
    %645 = vmatprep.subr.mxu0 0.0
    %646 = vmatpush1.xpose.msra.mxu0 0.0
    %647 = vmatprep.subr.mxu0 0.0
    %648 = vmatpush1.xpose.msra.mxu0 0.0
    %649 = vmatprep.subr.mxu0 0.0
    %650 = vmatpush1.xpose.msra.mxu0 0.0
    %651 = vmatprep.subr.mxu0 0.0
    %652 = vmatpush1.xpose.msra.mxu0 0.0
    %653 = vmatprep.subr.mxu0 0.0
    %654 = vmatpush1.xpose.msra.mxu0 0.0
    %655 = vmatprep.subr.mxu0 0.0
    %656 = vmatpush1.xpose.msra.mxu0 0.0
    %657 = vmatprep.subr.mxu0 0.0
    %658 = vmatpush1.xpose.msra.mxu0 0.0
    %659 = vmatprep.subr.mxu0 0.0
    %660 = vmatpush1.xpose.msra.mxu0 0.0
    %661 = vmatprep.subr.mxu0 0.0
    %662 = vmatpush1.xpose.msra.mxu0 0.0
    %663 = vmatprep.subr.mxu0 0.0
    %664 = vmatpush1.xpose.msra.mxu0 0.0
    %665 = vmatprep.subr.mxu0 0.0
    %666 = vmatpush1.xpose.msra.mxu0 0.0
    %667 = vmatprep.subr.mxu0 0.0
    %668 = vmatpush1.xpose.msra.mxu0 0.0
    %669 = vmatprep.subr.mxu0 0.0
    %670 = vmatpush1.xpose.msra.mxu0 0.0
    %671 = vmatprep.subr.mxu0 0.0
    %672 = vmatpush1.xpose.msra.mxu0 0.0
    %673 = vmatprep.subr.mxu0 0.0
    %674 = vmatpush1.xpose.msra.mxu0 0.0
    %675 = vmatprep.subr.mxu0 0.0
    %676 = vmatpush1.xpose.msra.mxu0 0.0
    %677 = vmatprep.subr.mxu0 0.0
    %678 = vmatpush1.xpose.msra.mxu0 0.0
    %679 = vmatprep.subr.mxu0 0.0
    %680 = vmatpush1.xpose.msra.mxu0 0.0
    %681 = vmatprep.subr.mxu0 0.0
    %682 = vmatpush1.xpose.msra.mxu0 0.0
    %683 = vmatprep.subr.mxu0 0.0
    %684 = vmatpush1.xpose.msra.mxu0 0.0
    %685 = vmatprep.subr.mxu0 0.0
    %686 = vmatpush1.xpose.msra.mxu0 0.0
    %687 = vmatprep.subr.mxu0 0.0
    %688 = vmatpush1.xpose.msra.mxu0 0.0
    %689 = vmatprep.subr.mxu0 0.0
    %690 = vmatpush1.xpose.msra.mxu0 0.0
    %691 = vmatprep.subr.mxu0 0.0
    %692 = vmatpush1.xpose.msra.mxu0 0.0
    %693 = vmatprep.mubr.f32.mxu0 0.0
    %694 = vmatmul.mubr.f32.gmra.mrb[0].mxu0 %v625
    %v695 = vpop.f32.mrb[0].mxu0
    %v696 = vadd.f32 0.0, %v695
    %v697 = vpop.f32.mrb[0].mxu0
    %698 = vdwg.mxu0
    %699 = vrot.lane.b32.xlu0 %v215, 112
    %v700 = vpop.permute.xlu0 %699
    %701 = vrot.lane.b32.xlu0 %v215, 80
    %v702 = vpop.permute.xlu0 %701
    %v703 = vsel %vm226, %v700, 0
    %v705 = vsel %vm226, %v702, 0
    %707 = vmatprep.subr.mxu0 0.0
    %708 = vmatpush1.xpose.msra.mxu0 %v705
    %709 = vmatprep.subr.mxu0 0.0
    %710 = vmatpush1.xpose.msra.mxu0 0.0
    %711 = vmatprep.subr.mxu0 0.0
    %712 = vmatpush1.xpose.msra.mxu0 0.0
    %713 = vmatprep.subr.mxu0 0.0
    %714 = vmatpush1.xpose.msra.mxu0 0.0
    %715 = vmatprep.subr.mxu0 0.0
    %716 = vmatpush1.xpose.msra.mxu0 0.0
    %717 = vmatprep.subr.mxu0 0.0
    %718 = vmatpush1.xpose.msra.mxu0 0.0
    %719 = vmatprep.subr.mxu0 0.0
    %720 = vmatpush1.xpose.msra.mxu0 0.0
    %721 = vmatprep.subr.mxu0 0.0
    %722 = vmatpush1.xpose.msra.mxu0 0.0
    %723 = vmatprep.subr.mxu0 0.0
    %724 = vmatpush1.xpose.msra.mxu0 0.0
    %725 = vmatprep.subr.mxu0 0.0
    %726 = vmatpush1.xpose.msra.mxu0 0.0
    %727 = vmatprep.subr.mxu0 0.0
    %728 = vmatpush1.xpose.msra.mxu0 0.0
    %729 = vmatprep.subr.mxu0 0.0
    %730 = vmatpush1.xpose.msra.mxu0 0.0
    %731 = vmatprep.subr.mxu0 0.0
    %732 = vmatpush1.xpose.msra.mxu0 0.0
    %733 = vmatprep.subr.mxu0 0.0
    %734 = vmatpush1.xpose.msra.mxu0 0.0
    %735 = vmatprep.subr.mxu0 0.0
    %736 = vmatpush1.xpose.msra.mxu0 0.0
    %737 = vmatprep.subr.mxu0 0.0
    %738 = vmatpush1.xpose.msra.mxu0 0.0
    %739 = vmatprep.subr.mxu0 0.0
    %740 = vmatpush1.xpose.msra.mxu0 0.0
    %741 = vmatprep.subr.mxu0 0.0
    %742 = vmatpush1.xpose.msra.mxu0 0.0
    %743 = vmatprep.subr.mxu0 0.0
    %744 = vmatpush1.xpose.msra.mxu0 0.0
    %745 = vmatprep.subr.mxu0 0.0
    %746 = vmatpush1.xpose.msra.mxu0 0.0
    %747 = vmatprep.subr.mxu0 0.0
    %748 = vmatpush1.xpose.msra.mxu0 0.0
    %749 = vmatprep.subr.mxu0 0.0
    %750 = vmatpush1.xpose.msra.mxu0 0.0
    %751 = vmatprep.subr.mxu0 0.0
    %752 = vmatpush1.xpose.msra.mxu0 0.0
    %753 = vmatprep.subr.mxu0 0.0
    %754 = vmatpush1.xpose.msra.mxu0 0.0
    %755 = vmatprep.subr.mxu0 0.0
    %756 = vmatpush1.xpose.msra.mxu0 0.0
    %757 = vmatprep.subr.mxu0 0.0
    %758 = vmatpush1.xpose.msra.mxu0 0.0
    %759 = vmatprep.subr.mxu0 0.0
    %760 = vmatpush1.xpose.msra.mxu0 0.0
    %761 = vmatprep.subr.mxu0 0.0
    %762 = vmatpush1.xpose.msra.mxu0 0.0
    %763 = vmatprep.subr.mxu0 0.0
    %764 = vmatpush1.xpose.msra.mxu0 0.0
    %765 = vmatprep.subr.mxu0 0.0
    %766 = vmatpush1.xpose.msra.mxu0 0.0
    %767 = vmatprep.subr.mxu0 0.0
    %768 = vmatpush1.xpose.msra.mxu0 0.0
    %769 = vmatprep.subr.mxu0 0.0
    %770 = vmatpush1.xpose.msra.mxu0 0.0
    %771 = vmatprep.mubr.f32.mxu0 0.0
    %772 = vmatmul.mubr.f32.gmra.mrb[0].mxu0 %v703
    %v773 = vpop.f32.mrb[0].mxu0
    %v774 = vadd.f32 0.0, %v773
    %v775 = vpop.f32.mrb[0].mxu0
    %776 = vdwg.mxu0
    %777 = vrot.lane.b32.xlu0 %v215, 104
    %v778 = vpop.permute.xlu0 %777
    %779 = vrot.lane.b32.xlu0 %v215, 72
    %v780 = vpop.permute.xlu0 %779
    %v781 = vsel %vm226, %v778, 0
    %v783 = vsel %vm226, %v780, 0
    %785 = vmatprep.subr.mxu0 0.0
    %786 = vmatpush1.xpose.msra.mxu0 %v783
    %787 = vmatprep.subr.mxu0 0.0
    %788 = vmatpush1.xpose.msra.mxu0 0.0
    %789 = vmatprep.subr.mxu0 0.0
    %790 = vmatpush1.xpose.msra.mxu0 0.0
    %791 = vmatprep.subr.mxu0 0.0
    %792 = vmatpush1.xpose.msra.mxu0 0.0
    %793 = vmatprep.subr.mxu0 0.0
    %794 = vmatpush1.xpose.msra.mxu0 0.0
    %795 = vmatprep.subr.mxu0 0.0
    %796 = vmatpush1.xpose.msra.mxu0 0.0
    %797 = vmatprep.subr.mxu0 0.0
    %798 = vmatpush1.xpose.msra.mxu0 0.0
    %799 = vmatprep.subr.mxu0 0.0
    %800 = vmatpush1.xpose.msra.mxu0 0.0
    %801 = vmatprep.subr.mxu0 0.0
    %802 = vmatpush1.xpose.msra.mxu0 0.0
    %803 = vmatprep.subr.mxu0 0.0
    %804 = vmatpush1.xpose.msra.mxu0 0.0
    %805 = vmatprep.subr.mxu0 0.0
    %806 = vmatpush1.xpose.msra.mxu0 0.0
    %807 = vmatprep.subr.mxu0 0.0
    %808 = vmatpush1.xpose.msra.mxu0 0.0
    %809 = vmatprep.subr.mxu0 0.0
    %810 = vmatpush1.xpose.msra.mxu0 0.0
    %811 = vmatprep.subr.mxu0 0.0
    %812 = vmatpush1.xpose.msra.mxu0 0.0
    %813 = vmatprep.subr.mxu0 0.0
    %814 = vmatpush1.xpose.msra.mxu0 0.0
    %815 = vmatprep.subr.mxu0 0.0
    %816 = vmatpush1.xpose.msra.mxu0 0.0
    %817 = vmatprep.subr.mxu0 0.0
    %818 = vmatpush1.xpose.msra.mxu0 0.0
    %819 = vmatprep.subr.mxu0 0.0
    %820 = vmatpush1.xpose.msra.mxu0 0.0
    %821 = vmatprep.subr.mxu0 0.0
    %822 = vmatpush1.xpose.msra.mxu0 0.0
    %823 = vmatprep.subr.mxu0 0.0
    %824 = vmatpush1.xpose.msra.mxu0 0.0
    %825 = vmatprep.subr.mxu0 0.0
    %826 = vmatpush1.xpose.msra.mxu0 0.0
    %827 = vmatprep.subr.mxu0 0.0
    %828 = vmatpush1.xpose.msra.mxu0 0.0
    %829 = vmatprep.subr.mxu0 0.0
    %830 = vmatpush1.xpose.msra.mxu0 0.0
    %831 = vmatprep.subr.mxu0 0.0
    %832 = vmatpush1.xpose.msra.mxu0 0.0
    %833 = vmatprep.subr.mxu0 0.0
    %834 = vmatpush1.xpose.msra.mxu0 0.0
    %835 = vmatprep.subr.mxu0 0.0
    %836 = vmatpush1.xpose.msra.mxu0 0.0
    %837 = vmatprep.subr.mxu0 0.0
    %838 = vmatpush1.xpose.msra.mxu0 0.0
    %839 = vmatprep.subr.mxu0 0.0
    %840 = vmatpush1.xpose.msra.mxu0 0.0
    %841 = vmatprep.subr.mxu0 0.0
    %842 = vmatpush1.xpose.msra.mxu0 0.0
    %843 = vmatprep.subr.mxu0 0.0
    %844 = vmatpush1.xpose.msra.mxu0 0.0
    %845 = vmatprep.subr.mxu0 0.0
    %846 = vmatpush1.xpose.msra.mxu0 0.0
    %847 = vmatprep.subr.mxu0 0.0
    %848 = vmatpush1.xpose.msra.mxu0 0.0
    %849 = vmatprep.mubr.f32.mxu0 0.0
    %850 = vmatmul.mubr.f32.gmra.mrb[0].mxu0 %v781
    %v851 = vpop.f32.mrb[0].mxu0
    %v852 = vadd.f32 0.0, %v851
    %v853 = vpop.f32.mrb[0].mxu0
    %854 = vdwg.mxu0
    %v855 = vsel %vm543, 1, 0
    %vm856 = vcmp.eq.s32.totalorder %v855, 1
    %v857 = vsel %vm856, %v618, -1e+30
    %v858 = vsel %vm856, %v696, -1e+30
    %v859 = vsel %vm856, %v774, -1e+30
    %v860 = vsel %vm856, %v852, -1e+30
    %v861 = vsel %vm226, %v537, -inf
    %862 = vmax.xlane.f32.xlu0 %v861
    %v863 = vpop.xlane.xlu0 %862
    %v864 = vsel %vm226, %v538, -inf
    %865 = vmax.xlane.f32.xlu0 %v864
    %v866 = vpop.xlane.xlu0 %865
    %v867 = vsel %vm226, %v539, -inf
    %868 = vmax.xlane.f32.xlu0 %v867
    %v869 = vpop.xlane.xlu0 %868
    %v870 = vsel %vm226, %v540, -inf
    %871 = vmax.xlane.f32.xlu0 %v870
    %v872 = vpop.xlane.xlu0 %871
    %v873 = vsel %vm226, %v857, -inf
    %874 = vmax.xlane.f32.xlu0 %v873
    %v875 = vpop.xlane.xlu0 %874
    %v876 = vsel %vm226, %v858, -inf
    %877 = vmax.xlane.f32.xlu0 %v876
    %v878 = vpop.xlane.xlu0 %877
    %v879 = vsel %vm226, %v859, -inf
    %880 = vmax.xlane.f32.xlu0 %v879
    %v881 = vpop.xlane.xlu0 %880
    %v882 = vsel %vm226, %v860, -inf
    %883 = vmax.xlane.f32.xlu0 %v882
    %v884 = vpop.xlane.xlu0 %883
    %v885 = vsub.f32 %v537, %v863
    %v886 = vsub.f32 %v538, %v866
    %v887 = vsub.f32 %v539, %v869
    %v888 = vsub.f32 %v540, %v872
    %v889 = vsub.f32 %v857, %v875
    %v890 = vsub.f32 %v858, %v878
    %v891 = vsub.f32 %v859, %v881
    %v892 = vsub.f32 %v860, %v884
    %v893 = vmul.f32 %v885, 1.442695
    %v894 = vpow.pop %v893
    %v895 = vmul.f32 %v886, 1.442695
    %v896 = vpow.pop %v895
    %v897 = vmul.f32 %v887, 1.442695
    %v898 = vpow.pop %v897
    %v899 = vmul.f32 %v888, 1.442695
    %v900 = vpow.pop %v899
    %v901 = vmul.f32 %v889, 1.442695
    %v902 = vpow.pop %v901
    %v903 = vmul.f32 %v890, 1.442695
    %v904 = vpow.pop %v903
    %v905 = vmul.f32 %v891, 1.442695
    %v906 = vpow.pop %v905
    %v907 = vmul.f32 %v892, 1.442695
    %v908 = vpow.pop %v907
    %v909 = vsel %vm226, %v894, 0.0
    %910 = vadd.xlane.f32.xlu0 %v909
    %v911 = vpop.xlane.xlu0 %910
    %v912 = vsel %vm226, %v896, 0.0
    %913 = vadd.xlane.f32.xlu0 %v912
    %v914 = vpop.xlane.xlu0 %913
    %v915 = vsel %vm226, %v898, 0.0
    %916 = vadd.xlane.f32.xlu0 %v915
    %v917 = vpop.xlane.xlu0 %916
    %v918 = vsel %vm226, %v900, 0.0
    %919 = vadd.xlane.f32.xlu0 %v918
    %v920 = vpop.xlane.xlu0 %919
    %v921 = vsel %vm226, %v902, 0.0
    %922 = vadd.xlane.f32.xlu0 %v921
    %v923 = vpop.xlane.xlu0 %922
    %v924 = vsel %vm226, %v904, 0.0
    %925 = vadd.xlane.f32.xlu0 %v924
    %v926 = vpop.xlane.xlu0 %925
    %v927 = vsel %vm226, %v906, 0.0
    %928 = vadd.xlane.f32.xlu0 %v927
    %v929 = vpop.xlane.xlu0 %928
    %v930 = vsel %vm226, %v908, 0.0
    %931 = vadd.xlane.f32.xlu0 %v930
    %v932 = vpop.xlane.xlu0 %931
    %v933 = vrcp.pop %v911
    %v934 = vrcp.pop %v914
    %v935 = vrcp.pop %v917
    %v936 = vrcp.pop %v920
    %v937 = vrcp.pop %v923
    %v938 = vrcp.pop %v926
    %v939 = vrcp.pop %v929
    %v940 = vrcp.pop %v932
    %v941 = vmul.f32 %v911, %v933
    %v942 = vmul.f32 %v914, %v934
    %v943 = vmul.f32 %v917, %v935
    %v944 = vmul.f32 %v920, %v936
    %v945 = vmul.f32 %v923, %v937
    %v946 = vmul.f32 %v926, %v938
    %v947 = vmul.f32 %v929, %v939
    %v948 = vmul.f32 %v932, %v940
    %v949 = vsub.f32 2.0, %v941
    %v950 = vsub.f32 2.0, %v942
    %v951 = vsub.f32 2.0, %v943
    %v952 = vsub.f32 2.0, %v944
    %v953 = vsub.f32 2.0, %v945
    %v954 = vsub.f32 2.0, %v946
    %v955 = vsub.f32 2.0, %v947
    %v956 = vsub.f32 2.0, %v948
    %v957 = vmul.f32 %v933, %v949
    %v958 = vmul.f32 %v934, %v950
    %v959 = vmul.f32 %v935, %v951
    %v960 = vmul.f32 %v936, %v952
    %v961 = vmul.f32 %v937, %v953
    %v962 = vmul.f32 %v938, %v954
    %v963 = vmul.f32 %v939, %v955
    %v964 = vmul.f32 %v940, %v956
    %v965 = vmul.f32 %v894, %v957
    %v966 = vmul.f32 %v896, %v958
    %v967 = vmul.f32 %v898, %v959
    %v968 = vmul.f32 %v900, %v960
    %v969 = vmul.f32 %v902, %v961
    %v970 = vmul.f32 %v904, %v962
    %v971 = vmul.f32 %v906, %v963
    %v972 = vmul.f32 %v908, %v964
    %973 = vst.msk [vmem:[#allocation8] sm:$0xff] %vm226, %v965
    %974 = vst.msk [vmem:[#allocation8 + $0x8] sm:$0xff] %vm226, %v966
    %975 = vst.msk [vmem:[#allocation8 + $0x10] sm:$0xff] %vm226, %v967
    %976 = vst.msk [vmem:[#allocation8 + $0x18] sm:$0xff] %vm226, %v968
    %977 = vst.msk [vmem:[#allocation8 + $0x20] sm:$0xff] %vm226, %v969
    %978 = vst.msk [vmem:[#allocation8 + $0x28] sm:$0xff] %vm226, %v970
    %979 = vst.msk [vmem:[#allocation8 + $0x30] sm:$0xff] %vm226, %v971
    %980 = vst.msk [vmem:[#allocation8 + $0x38] sm:$0xff] %vm226, %v972
    %981 = vrot.lane.b32.xlu0 %v210, 64
    %v982 = vpop.permute.xlu0 %981
    %v985 = vsel %vm226, %v965, 0
    %987 = vmatprep.subr.mxu0 0.0
    %988 = vmatpush1.msra.mxu0 %v982
    %989 = vmatprep.subr.mxu0 0.0
    %990 = vmatpush1.msra.mxu0 0.0
    %991 = vmatprep.subr.mxu0 0.0
    %992 = vmatpush1.msra.mxu0 0.0
    %993 = vmatprep.subr.mxu0 0.0
    %994 = vmatpush1.msra.mxu0 0.0
    %995 = vmatprep.subr.mxu0 0.0
    %996 = vmatpush1.msra.mxu0 0.0
    %997 = vmatprep.subr.mxu0 0.0
    %998 = vmatpush1.msra.mxu0 0.0
    %999 = vmatprep.subr.mxu0 0.0
    %1000 = vmatpush1.msra.mxu0 0.0
    %1001 = vmatprep.subr.mxu0 0.0
    %1002 = vmatpush1.msra.mxu0 0.0
    %1003 = vmatprep.subr.mxu0 0.0
    %1004 = vmatpush1.msra.mxu0 0.0
    %1005 = vmatprep.subr.mxu0 0.0
    %1006 = vmatpush1.msra.mxu0 0.0
    %1007 = vmatprep.subr.mxu0 0.0
    %1008 = vmatpush1.msra.mxu0 0.0
    %1009 = vmatprep.subr.mxu0 0.0
    %1010 = vmatpush1.msra.mxu0 0.0
    %1011 = vmatprep.subr.mxu0 0.0
    %1012 = vmatpush1.msra.mxu0 0.0
    %1013 = vmatprep.subr.mxu0 0.0
    %1014 = vmatpush1.msra.mxu0 0.0
    %1015 = vmatprep.subr.mxu0 0.0
    %1016 = vmatpush1.msra.mxu0 0.0
    %1017 = vmatprep.subr.mxu0 0.0
    %1018 = vmatpush1.msra.mxu0 0.0
    %1019 = vmatprep.subr.mxu0 0.0
    %1020 = vmatpush1.msra.mxu0 0.0
    %1021 = vmatprep.subr.mxu0 0.0
    %1022 = vmatpush1.msra.mxu0 0.0
    %1023 = vmatprep.subr.mxu0 0.0
    %1024 = vmatpush1.msra.mxu0 0.0
    %1025 = vmatprep.subr.mxu0 0.0
    %1026 = vmatpush1.msra.mxu0 0.0
    %1027 = vmatprep.subr.mxu0 0.0
    %1028 = vmatpush1.msra.mxu0 0.0
    %1029 = vmatprep.subr.mxu0 0.0
    %1030 = vmatpush1.msra.mxu0 0.0
    %1031 = vmatprep.subr.mxu0 0.0
    %1032 = vmatpush1.msra.mxu0 0.0
    %1033 = vmatprep.subr.mxu0 0.0
    %1034 = vmatpush1.msra.mxu0 0.0
    %1035 = vmatprep.subr.mxu0 0.0
    %1036 = vmatpush1.msra.mxu0 0.0
    %1037 = vmatprep.subr.mxu0 0.0
    %1038 = vmatpush1.msra.mxu0 0.0
    %1039 = vmatprep.subr.mxu0 0.0
    %1040 = vmatpush1.msra.mxu0 0.0
    %1041 = vmatprep.subr.mxu0 0.0
    %1042 = vmatpush1.msra.mxu0 0.0
    %1043 = vmatprep.subr.mxu0 0.0
    %1044 = vmatpush1.msra.mxu0 0.0
    %1045 = vmatprep.subr.mxu0 0.0
    %1046 = vmatpush1.msra.mxu0 0.0
    %1047 = vmatprep.subr.mxu0 0.0
    %1048 = vmatpush1.msra.mxu0 0.0
    %1049 = vmatprep.subr.mxu0 0.0
    %1050 = vmatpush1.msra.mxu0 0.0
    %1051 = vmatprep.mubr.f32.mxu0 0.0
    %1052 = vmatmul.mubr.f32.gmra.mrb[0].mxu0 %v985
    %v1053 = vpop.f32.mrb[0].mxu0
    %v1054 = vadd.f32 0.0, %v1053
    %v1055 = vpop.f32.mrb[0].mxu0
    %1056 = vdwg.mxu0
    %1057 = vrot.lane.b32.xlu0 %v210, 56
    %v1058 = vpop.permute.xlu0 %1057
    %v1061 = vsel %vm226, %v966, 0
    %1063 = vmatprep.subr.mxu0 0.0
    %1064 = vmatpush1.msra.mxu0 %v1058
    %1065 = vmatprep.subr.mxu0 0.0
    %1066 = vmatpush1.msra.mxu0 0.0
    %1067 = vmatprep.subr.mxu0 0.0
    %1068 = vmatpush1.msra.mxu0 0.0
    %1069 = vmatprep.subr.mxu0 0.0
    %1070 = vmatpush1.msra.mxu0 0.0
    %1071 = vmatprep.subr.mxu0 0.0
    %1072 = vmatpush1.msra.mxu0 0.0
    %1073 = vmatprep.subr.mxu0 0.0
    %1074 = vmatpush1.msra.mxu0 0.0
    %1075 = vmatprep.subr.mxu0 0.0
    %1076 = vmatpush1.msra.mxu0 0.0
    %1077 = vmatprep.subr.mxu0 0.0
    %1078 = vmatpush1.msra.mxu0 0.0
    %1079 = vmatprep.subr.mxu0 0.0
    %1080 = vmatpush1.msra.mxu0 0.0
    %1081 = vmatprep.subr.mxu0 0.0
    %1082 = vmatpush1.msra.mxu0 0.0
    %1083 = vmatprep.subr.mxu0 0.0
    %1084 = vmatpush1.msra.mxu0 0.0
    %1085 = vmatprep.subr.mxu0 0.0
    %1086 = vmatpush1.msra.mxu0 0.0
    %1087 = vmatprep.subr.mxu0 0.0
    %1088 = vmatpush1.msra.mxu0 0.0
    %1089 = vmatprep.subr.mxu0 0.0
    %1090 = vmatpush1.msra.mxu0 0.0
    %1091 = vmatprep.subr.mxu0 0.0
    %1092 = vmatpush1.msra.mxu0 0.0
    %1093 = vmatprep.subr.mxu0 0.0
    %1094 = vmatpush1.msra.mxu0 0.0
    %1095 = vmatprep.subr.mxu0 0.0
    %1096 = vmatpush1.msra.mxu0 0.0
    %1097 = vmatprep.subr.mxu0 0.0
    %1098 = vmatpush1.msra.mxu0 0.0
    %1099 = vmatprep.subr.mxu0 0.0
    %1100 = vmatpush1.msra.mxu0 0.0
    %1101 = vmatprep.subr.mxu0 0.0
    %1102 = vmatpush1.msra.mxu0 0.0
    %1103 = vmatprep.subr.mxu0 0.0
    %1104 = vmatpush1.msra.mxu0 0.0
    %1105 = vmatprep.subr.mxu0 0.0
    %1106 = vmatpush1.msra.mxu0 0.0
    %1107 = vmatprep.subr.mxu0 0.0
    %1108 = vmatpush1.msra.mxu0 0.0
    %1109 = vmatprep.subr.mxu0 0.0
    %1110 = vmatpush1.msra.mxu0 0.0
    %1111 = vmatprep.subr.mxu0 0.0
    %1112 = vmatpush1.msra.mxu0 0.0
    %1113 = vmatprep.subr.mxu0 0.0
    %1114 = vmatpush1.msra.mxu0 0.0
    %1115 = vmatprep.subr.mxu0 0.0
    %1116 = vmatpush1.msra.mxu0 0.0
    %1117 = vmatprep.subr.mxu0 0.0
    %1118 = vmatpush1.msra.mxu0 0.0
    %1119 = vmatprep.subr.mxu0 0.0
    %1120 = vmatpush1.msra.mxu0 0.0
    %1121 = vmatprep.subr.mxu0 0.0
    %1122 = vmatpush1.msra.mxu0 0.0
    %1123 = vmatprep.subr.mxu0 0.0
    %1124 = vmatpush1.msra.mxu0 0.0
    %1125 = vmatprep.subr.mxu0 0.0
    %1126 = vmatpush1.msra.mxu0 0.0
    %1127 = vmatprep.mubr.f32.mxu0 0.0
    %1128 = vmatmul.mubr.f32.gmra.mrb[0].mxu0 %v1061
    %v1129 = vpop.f32.mrb[0].mxu0
    %v1130 = vadd.f32 0.0, %v1129
    %v1131 = vpop.f32.mrb[0].mxu0
    %1132 = vdwg.mxu0
    %1133 = vrot.lane.b32.xlu0 %v210, 48
    %v1134 = vpop.permute.xlu0 %1133
    %v1137 = vsel %vm226, %v967, 0
    %1139 = vmatprep.subr.mxu0 0.0
    %1140 = vmatpush1.msra.mxu0 %v1134
    %1141 = vmatprep.subr.mxu0 0.0
    %1142 = vmatpush1.msra.mxu0 0.0
    %1143 = vmatprep.subr.mxu0 0.0
    %1144 = vmatpush1.msra.mxu0 0.0
    %1145 = vmatprep.subr.mxu0 0.0
    %1146 = vmatpush1.msra.mxu0 0.0
    %1147 = vmatprep.subr.mxu0 0.0
    %1148 = vmatpush1.msra.mxu0 0.0
    %1149 = vmatprep.subr.mxu0 0.0
    %1150 = vmatpush1.msra.mxu0 0.0
    %1151 = vmatprep.subr.mxu0 0.0
    %1152 = vmatpush1.msra.mxu0 0.0
    %1153 = vmatprep.subr.mxu0 0.0
    %1154 = vmatpush1.msra.mxu0 0.0
    %1155 = vmatprep.subr.mxu0 0.0
    %1156 = vmatpush1.msra.mxu0 0.0
    %1157 = vmatprep.subr.mxu0 0.0
    %1158 = vmatpush1.msra.mxu0 0.0
    %1159 = vmatprep.subr.mxu0 0.0
    %1160 = vmatpush1.msra.mxu0 0.0
    %1161 = vmatprep.subr.mxu0 0.0
    %1162 = vmatpush1.msra.mxu0 0.0
    %1163 = vmatprep.subr.mxu0 0.0
    %1164 = vmatpush1.msra.mxu0 0.0
    %1165 = vmatprep.subr.mxu0 0.0
    %1166 = vmatpush1.msra.mxu0 0.0
    %1167 = vmatprep.subr.mxu0 0.0
    %1168 = vmatpush1.msra.mxu0 0.0
    %1169 = vmatprep.subr.mxu0 0.0
    %1170 = vmatpush1.msra.mxu0 0.0
    %1171 = vmatprep.subr.mxu0 0.0
    %1172 = vmatpush1.msra.mxu0 0.0
    %1173 = vmatprep.subr.mxu0 0.0
    %1174 = vmatpush1.msra.mxu0 0.0
    %1175 = vmatprep.subr.mxu0 0.0
    %1176 = vmatpush1.msra.mxu0 0.0
    %1177 = vmatprep.subr.mxu0 0.0
    %1178 = vmatpush1.msra.mxu0 0.0
    %1179 = vmatprep.subr.mxu0 0.0
    %1180 = vmatpush1.msra.mxu0 0.0
    %1181 = vmatprep.subr.mxu0 0.0
    %1182 = vmatpush1.msra.mxu0 0.0
    %1183 = vmatprep.subr.mxu0 0.0
    %1184 = vmatpush1.msra.mxu0 0.0
    %1185 = vmatprep.subr.mxu0 0.0
    %1186 = vmatpush1.msra.mxu0 0.0
    %1187 = vmatprep.subr.mxu0 0.0
    %1188 = vmatpush1.msra.mxu0 0.0
    %1189 = vmatprep.subr.mxu0 0.0
    %1190 = vmatpush1.msra.mxu0 0.0
    %1191 = vmatprep.subr.mxu0 0.0
    %1192 = vmatpush1.msra.mxu0 0.0
    %1193 = vmatprep.subr.mxu0 0.0
    %1194 = vmatpush1.msra.mxu0 0.0
    %1195 = vmatprep.subr.mxu0 0.0
    %1196 = vmatpush1.msra.mxu0 0.0
    %1197 = vmatprep.subr.mxu0 0.0
    %1198 = vmatpush1.msra.mxu0 0.0
    %1199 = vmatprep.subr.mxu0 0.0
    %1200 = vmatpush1.msra.mxu0 0.0
    %1201 = vmatprep.subr.mxu0 0.0
    %1202 = vmatpush1.msra.mxu0 0.0
    %1203 = vmatprep.mubr.f32.mxu0 0.0
    %1204 = vmatmul.mubr.f32.gmra.mrb[0].mxu0 %v1137
    %v1205 = vpop.f32.mrb[0].mxu0
    %v1206 = vadd.f32 0.0, %v1205
    %v1207 = vpop.f32.mrb[0].mxu0
    %1208 = vdwg.mxu0
    %1209 = vrot.lane.b32.xlu0 %v210, 40
    %v1210 = vpop.permute.xlu0 %1209
    %v1213 = vsel %vm226, %v968, 0
    %1215 = vmatprep.subr.mxu0 0.0
    %1216 = vmatpush1.msra.mxu0 %v1210
    %1217 = vmatprep.subr.mxu0 0.0
    %1218 = vmatpush1.msra.mxu0 0.0
    %1219 = vmatprep.subr.mxu0 0.0
    %1220 = vmatpush1.msra.mxu0 0.0
    %1221 = vmatprep.subr.mxu0 0.0
    %1222 = vmatpush1.msra.mxu0 0.0
    %1223 = vmatprep.subr.mxu0 0.0
    %1224 = vmatpush1.msra.mxu0 0.0
    %1225 = vmatprep.subr.mxu0 0.0
    %1226 = vmatpush1.msra.mxu0 0.0
    %1227 = vmatprep.subr.mxu0 0.0
    %1228 = vmatpush1.msra.mxu0 0.0
    %1229 = vmatprep.subr.mxu0 0.0
    %1230 = vmatpush1.msra.mxu0 0.0
    %1231 = vmatprep.subr.mxu0 0.0
    %1232 = vmatpush1.msra.mxu0 0.0
    %1233 = vmatprep.subr.mxu0 0.0
    %1234 = vmatpush1.msra.mxu0 0.0
    %1235 = vmatprep.subr.mxu0 0.0
    %1236 = vmatpush1.msra.mxu0 0.0
    %1237 = vmatprep.subr.mxu0 0.0
    %1238 = vmatpush1.msra.mxu0 0.0
    %1239 = vmatprep.subr.mxu0 0.0
    %1240 = vmatpush1.msra.mxu0 0.0
    %1241 = vmatprep.subr.mxu0 0.0
    %1242 = vmatpush1.msra.mxu0 0.0
    %1243 = vmatprep.subr.mxu0 0.0
    %1244 = vmatpush1.msra.mxu0 0.0
    %1245 = vmatprep.subr.mxu0 0.0
    %1246 = vmatpush1.msra.mxu0 0.0
    %1247 = vmatprep.subr.mxu0 0.0
    %1248 = vmatpush1.msra.mxu0 0.0
    %1249 = vmatprep.subr.mxu0 0.0
    %1250 = vmatpush1.msra.mxu0 0.0
    %1251 = vmatprep.subr.mxu0 0.0
    %1252 = vmatpush1.msra.mxu0 0.0
    %1253 = vmatprep.subr.mxu0 0.0
    %1254 = vmatpush1.msra.mxu0 0.0
    %1255 = vmatprep.subr.mxu0 0.0
    %1256 = vmatpush1.msra.mxu0 0.0
    %1257 = vmatprep.subr.mxu0 0.0
    %1258 = vmatpush1.msra.mxu0 0.0
    %1259 = vmatprep.subr.mxu0 0.0
    %1260 = vmatpush1.msra.mxu0 0.0
    %1261 = vmatprep.subr.mxu0 0.0
    %1262 = vmatpush1.msra.mxu0 0.0
    %1263 = vmatprep.subr.mxu0 0.0
    %1264 = vmatpush1.msra.mxu0 0.0
    %1265 = vmatprep.subr.mxu0 0.0
    %1266 = vmatpush1.msra.mxu0 0.0
    %1267 = vmatprep.subr.mxu0 0.0
    %1268 = vmatpush1.msra.mxu0 0.0
    %1269 = vmatprep.subr.mxu0 0.0
    %1270 = vmatpush1.msra.mxu0 0.0
    %1271 = vmatprep.subr.mxu0 0.0
    %1272 = vmatpush1.msra.mxu0 0.0
    %1273 = vmatprep.subr.mxu0 0.0
    %1274 = vmatpush1.msra.mxu0 0.0
    %1275 = vmatprep.subr.mxu0 0.0
    %1276 = vmatpush1.msra.mxu0 0.0
    %1277 = vmatprep.subr.mxu0 0.0
    %1278 = vmatpush1.msra.mxu0 0.0
    %1279 = vmatprep.mubr.f32.mxu0 0.0
    %1280 = vmatmul.mubr.f32.gmra.mrb[0].mxu0 %v1213
    %v1281 = vpop.f32.mrb[0].mxu0
    %v1282 = vadd.f32 0.0, %v1281
    %v1283 = vpop.f32.mrb[0].mxu0
    %1284 = vdwg.mxu0
    %1286 = vrot.lane.b32.xlu0 %v1130, 8
    %v1287 = vpop.permute.xlu0 %1286
    %1290 = vrot.lane.b32.xlu0 %v1206, 16
    %v1291 = vpop.permute.xlu0 %1290
    %1294 = vrot.lane.b32.xlu0 %v1282, 24
    %v1295 = vpop.permute.xlu0 %1294
    %v1297 = vsel %vm226, %v1054, %v1287
    %vm1298 = vcmask 130048
    %v1299 = vsel %vm1298, %v1297, %v1291
    %vm1300 = vcmask 195584
    %v1301 = vsel %vm1300, %v1299, %v1295
    %1302 = vrot.lane.b32.xlu0 %v215, 64
    %v1303 = vpop.permute.xlu0 %1302
    %v1306 = vsel %vm226, %v969, 0
    %1308 = vmatprep.subr.mxu0 0.0
    %1309 = vmatpush1.msra.mxu0 %v1303
    %1310 = vmatprep.subr.mxu0 0.0
    %1311 = vmatpush1.msra.mxu0 0.0
    %1312 = vmatprep.subr.mxu0 0.0
    %1313 = vmatpush1.msra.mxu0 0.0
    %1314 = vmatprep.subr.mxu0 0.0
    %1315 = vmatpush1.msra.mxu0 0.0
    %1316 = vmatprep.subr.mxu0 0.0
    %1317 = vmatpush1.msra.mxu0 0.0
    %1318 = vmatprep.subr.mxu0 0.0
    %1319 = vmatpush1.msra.mxu0 0.0
    %1320 = vmatprep.subr.mxu0 0.0
    %1321 = vmatpush1.msra.mxu0 0.0
    %1322 = vmatprep.subr.mxu0 0.0
    %1323 = vmatpush1.msra.mxu0 0.0
    %1324 = vmatprep.subr.mxu0 0.0
    %1325 = vmatpush1.msra.mxu0 0.0
    %1326 = vmatprep.subr.mxu0 0.0
    %1327 = vmatpush1.msra.mxu0 0.0
    %1328 = vmatprep.subr.mxu0 0.0
    %1329 = vmatpush1.msra.mxu0 0.0
    %1330 = vmatprep.subr.mxu0 0.0
    %1331 = vmatpush1.msra.mxu0 0.0
    %1332 = vmatprep.subr.mxu0 0.0
    %1333 = vmatpush1.msra.mxu0 0.0
    %1334 = vmatprep.subr.mxu0 0.0
    %1335 = vmatpush1.msra.mxu0 0.0
    %1336 = vmatprep.subr.mxu0 0.0
    %1337 = vmatpush1.msra.mxu0 0.0
    %1338 = vmatprep.subr.mxu0 0.0
    %1339 = vmatpush1.msra.mxu0 0.0
    %1340 = vmatprep.subr.mxu0 0.0
    %1341 = vmatpush1.msra.mxu0 0.0
    %1342 = vmatprep.subr.mxu0 0.0
    %1343 = vmatpush1.msra.mxu0 0.0
    %1344 = vmatprep.subr.mxu0 0.0
    %1345 = vmatpush1.msra.mxu0 0.0
    %1346 = vmatprep.subr.mxu0 0.0
    %1347 = vmatpush1.msra.mxu0 0.0
    %1348 = vmatprep.subr.mxu0 0.0
    %1349 = vmatpush1.msra.mxu0 0.0
    %1350 = vmatprep.subr.mxu0 0.0
    %1351 = vmatpush1.msra.mxu0 0.0
    %1352 = vmatprep.subr.mxu0 0.0
    %1353 = vmatpush1.msra.mxu0 0.0
    %1354 = vmatprep.subr.mxu0 0.0
    %1355 = vmatpush1.msra.mxu0 0.0
    %1356 = vmatprep.subr.mxu0 0.0
    %1357 = vmatpush1.msra.mxu0 0.0
    %1358 = vmatprep.subr.mxu0 0.0
    %1359 = vmatpush1.msra.mxu0 0.0
    %1360 = vmatprep.subr.mxu0 0.0
    %1361 = vmatpush1.msra.mxu0 0.0
    %1362 = vmatprep.subr.mxu0 0.0
    %1363 = vmatpush1.msra.mxu0 0.0
    %1364 = vmatprep.subr.mxu0 0.0
    %1365 = vmatpush1.msra.mxu0 0.0
    %1366 = vmatprep.subr.mxu0 0.0
    %1367 = vmatpush1.msra.mxu0 0.0
    %1368 = vmatprep.subr.mxu0 0.0
    %1369 = vmatpush1.msra.mxu0 0.0
    %1370 = vmatprep.subr.mxu0 0.0
    %1371 = vmatpush1.msra.mxu0 0.0
    %1372 = vmatprep.mubr.f32.mxu0 0.0
    %1373 = vmatmul.mubr.f32.gmra.mrb[0].mxu0 %v1306
    %v1374 = vpop.f32.mrb[0].mxu0
    %v1375 = vadd.f32 0.0, %v1374
    %v1376 = vpop.f32.mrb[0].mxu0
    %1377 = vdwg.mxu0
    %1378 = vrot.lane.b32.xlu0 %v215, 56
    %v1379 = vpop.permute.xlu0 %1378
    %v1382 = vsel %vm226, %v970, 0
    %1384 = vmatprep.subr.mxu0 0.0
    %1385 = vmatpush1.msra.mxu0 %v1379
    %1386 = vmatprep.subr.mxu0 0.0
    %1387 = vmatpush1.msra.mxu0 0.0
    %1388 = vmatprep.subr.mxu0 0.0
    %1389 = vmatpush1.msra.mxu0 0.0
    %1390 = vmatprep.subr.mxu0 0.0
    %1391 = vmatpush1.msra.mxu0 0.0
    %1392 = vmatprep.subr.mxu0 0.0
    %1393 = vmatpush1.msra.mxu0 0.0
    %1394 = vmatprep.subr.mxu0 0.0
    %1395 = vmatpush1.msra.mxu0 0.0
    %1396 = vmatprep.subr.mxu0 0.0
    %1397 = vmatpush1.msra.mxu0 0.0
    %1398 = vmatprep.subr.mxu0 0.0
    %1399 = vmatpush1.msra.mxu0 0.0
    %1400 = vmatprep.subr.mxu0 0.0
    %1401 = vmatpush1.msra.mxu0 0.0
    %1402 = vmatprep.subr.mxu0 0.0
    %1403 = vmatpush1.msra.mxu0 0.0
    %1404 = vmatprep.subr.mxu0 0.0
    %1405 = vmatpush1.msra.mxu0 0.0
    %1406 = vmatprep.subr.mxu0 0.0
    %1407 = vmatpush1.msra.mxu0 0.0
    %1408 = vmatprep.subr.mxu0 0.0
    %1409 = vmatpush1.msra.mxu0 0.0
    %1410 = vmatprep.subr.mxu0 0.0
    %1411 = vmatpush1.msra.mxu0 0.0
    %1412 = vmatprep.subr.mxu0 0.0
    %1413 = vmatpush1.msra.mxu0 0.0
    %1414 = vmatprep.subr.mxu0 0.0
    %1415 = vmatpush1.msra.mxu0 0.0
    %1416 = vmatprep.subr.mxu0 0.0
    %1417 = vmatpush1.msra.mxu0 0.0
    %1418 = vmatprep.subr.mxu0 0.0
    %1419 = vmatpush1.msra.mxu0 0.0
    %1420 = vmatprep.subr.mxu0 0.0
    %1421 = vmatpush1.msra.mxu0 0.0
    %1422 = vmatprep.subr.mxu0 0.0
    %1423 = vmatpush1.msra.mxu0 0.0
    %1424 = vmatprep.subr.mxu0 0.0
    %1425 = vmatpush1.msra.mxu0 0.0
    %1426 = vmatprep.subr.mxu0 0.0
    %1427 = vmatpush1.msra.mxu0 0.0
    %1428 = vmatprep.subr.mxu0 0.0
    %1429 = vmatpush1.msra.mxu0 0.0
    %1430 = vmatprep.subr.mxu0 0.0
    %1431 = vmatpush1.msra.mxu0 0.0
    %1432 = vmatprep.subr.mxu0 0.0
    %1433 = vmatpush1.msra.mxu0 0.0
    %1434 = vmatprep.subr.mxu0 0.0
    %1435 = vmatpush1.msra.mxu0 0.0
    %1436 = vmatprep.subr.mxu0 0.0
    %1437 = vmatpush1.msra.mxu0 0.0
    %1438 = vmatprep.subr.mxu0 0.0
    %1439 = vmatpush1.msra.mxu0 0.0
    %1440 = vmatprep.subr.mxu0 0.0
    %1441 = vmatpush1.msra.mxu0 0.0
    %1442 = vmatprep.subr.mxu0 0.0
    %1443 = vmatpush1.msra.mxu0 0.0
    %1444 = vmatprep.subr.mxu0 0.0
    %1445 = vmatpush1.msra.mxu0 0.0
    %1446 = vmatprep.subr.mxu0 0.0
    %1447 = vmatpush1.msra.mxu0 0.0
    %1448 = vmatprep.mubr.f32.mxu0 0.0
    %1449 = vmatmul.mubr.f32.gmra.mrb[0].mxu0 %v1382
    %v1450 = vpop.f32.mrb[0].mxu0
    %v1451 = vadd.f32 0.0, %v1450
    %v1452 = vpop.f32.mrb[0].mxu0
    %1453 = vdwg.mxu0
    %1454 = vrot.lane.b32.xlu0 %v215, 48
    %v1455 = vpop.permute.xlu0 %1454
    %v1458 = vsel %vm226, %v971, 0
    %1460 = vmatprep.subr.mxu0 0.0
    %1461 = vmatpush1.msra.mxu0 %v1455
    %1462 = vmatprep.subr.mxu0 0.0
    %1463 = vmatpush1.msra.mxu0 0.0
    %1464 = vmatprep.subr.mxu0 0.0
    %1465 = vmatpush1.msra.mxu0 0.0
    %1466 = vmatprep.subr.mxu0 0.0
    %1467 = vmatpush1.msra.mxu0 0.0
    %1468 = vmatprep.subr.mxu0 0.0
    %1469 = vmatpush1.msra.mxu0 0.0
    %1470 = vmatprep.subr.mxu0 0.0
    %1471 = vmatpush1.msra.mxu0 0.0
    %1472 = vmatprep.subr.mxu0 0.0
    %1473 = vmatpush1.msra.mxu0 0.0
    %1474 = vmatprep.subr.mxu0 0.0
    %1475 = vmatpush1.msra.mxu0 0.0
    %1476 = vmatprep.subr.mxu0 0.0
    %1477 = vmatpush1.msra.mxu0 0.0
    %1478 = vmatprep.subr.mxu0 0.0
    %1479 = vmatpush1.msra.mxu0 0.0
    %1480 = vmatprep.subr.mxu0 0.0
    %1481 = vmatpush1.msra.mxu0 0.0
    %1482 = vmatprep.subr.mxu0 0.0
    %1483 = vmatpush1.msra.mxu0 0.0
    %1484 = vmatprep.subr.mxu0 0.0
    %1485 = vmatpush1.msra.mxu0 0.0
    %1486 = vmatprep.subr.mxu0 0.0
    %1487 = vmatpush1.msra.mxu0 0.0
    %1488 = vmatprep.subr.mxu0 0.0
    %1489 = vmatpush1.msra.mxu0 0.0
    %1490 = vmatprep.subr.mxu0 0.0
    %1491 = vmatpush1.msra.mxu0 0.0
    %1492 = vmatprep.subr.mxu0 0.0
    %1493 = vmatpush1.msra.mxu0 0.0
    %1494 = vmatprep.subr.mxu0 0.0
    %1495 = vmatpush1.msra.mxu0 0.0
    %1496 = vmatprep.subr.mxu0 0.0
    %1497 = vmatpush1.msra.mxu0 0.0
    %1498 = vmatprep.subr.mxu0 0.0
    %1499 = vmatpush1.msra.mxu0 0.0
    %1500 = vmatprep.subr.mxu0 0.0
    %1501 = vmatpush1.msra.mxu0 0.0
    %1502 = vmatprep.subr.mxu0 0.0
    %1503 = vmatpush1.msra.mxu0 0.0
    %1504 = vmatprep.subr.mxu0 0.0
    %1505 = vmatpush1.msra.mxu0 0.0
    %1506 = vmatprep.subr.mxu0 0.0
    %1507 = vmatpush1.msra.mxu0 0.0
    %1508 = vmatprep.subr.mxu0 0.0
    %1509 = vmatpush1.msra.mxu0 0.0
    %1510 = vmatprep.subr.mxu0 0.0
    %1511 = vmatpush1.msra.mxu0 0.0
    %1512 = vmatprep.subr.mxu0 0.0
    %1513 = vmatpush1.msra.mxu0 0.0
    %1514 = vmatprep.subr.mxu0 0.0
    %1515 = vmatpush1.msra.mxu0 0.0
    %1516 = vmatprep.subr.mxu0 0.0
    %1517 = vmatpush1.msra.mxu0 0.0
    %1518 = vmatprep.subr.mxu0 0.0
    %1519 = vmatpush1.msra.mxu0 0.0
    %1520 = vmatprep.subr.mxu0 0.0
    %1521 = vmatpush1.msra.mxu0 0.0
    %1522 = vmatprep.subr.mxu0 0.0
    %1523 = vmatpush1.msra.mxu0 0.0
    %1524 = vmatprep.mubr.f32.mxu0 0.0
    %1525 = vmatmul.mubr.f32.gmra.mrb[0].mxu0 %v1458
    %v1526 = vpop.f32.mrb[0].mxu0
    %v1527 = vadd.f32 0.0, %v1526
    %v1528 = vpop.f32.mrb[0].mxu0
    %1529 = vdwg.mxu0
    %1530 = vrot.lane.b32.xlu0 %v215, 40
    %v1531 = vpop.permute.xlu0 %1530
    %v1534 = vsel %vm226, %v972, 0
    %1536 = vmatprep.subr.mxu0 0.0
    %1537 = vmatpush1.msra.mxu0 %v1531
    %1538 = vmatprep.subr.mxu0 0.0
    %1539 = vmatpush1.msra.mxu0 0.0
    %1540 = vmatprep.subr.mxu0 0.0
    %1541 = vmatpush1.msra.mxu0 0.0
    %1542 = vmatprep.subr.mxu0 0.0
    %1543 = vmatpush1.msra.mxu0 0.0
    %1544 = vmatprep.subr.mxu0 0.0
    %1545 = vmatpush1.msra.mxu0 0.0
    %1546 = vmatprep.subr.mxu0 0.0
    %1547 = vmatpush1.msra.mxu0 0.0
    %1548 = vmatprep.subr.mxu0 0.0
    %1549 = vmatpush1.msra.mxu0 0.0
    %1550 = vmatprep.subr.mxu0 0.0
    %1551 = vmatpush1.msra.mxu0 0.0
    %1552 = vmatprep.subr.mxu0 0.0
    %1553 = vmatpush1.msra.mxu0 0.0
    %1554 = vmatprep.subr.mxu0 0.0
    %1555 = vmatpush1.msra.mxu0 0.0
    %1556 = vmatprep.subr.mxu0 0.0
    %1557 = vmatpush1.msra.mxu0 0.0
    %1558 = vmatprep.subr.mxu0 0.0
    %1559 = vmatpush1.msra.mxu0 0.0
    %1560 = vmatprep.subr.mxu0 0.0
    %1561 = vmatpush1.msra.mxu0 0.0
    %1562 = vmatprep.subr.mxu0 0.0
    %1563 = vmatpush1.msra.mxu0 0.0
    %1564 = vmatprep.subr.mxu0 0.0
    %1565 = vmatpush1.msra.mxu0 0.0
    %1566 = vmatprep.subr.mxu0 0.0
    %1567 = vmatpush1.msra.mxu0 0.0
    %1568 = vmatprep.subr.mxu0 0.0
    %1569 = vmatpush1.msra.mxu0 0.0
    %1570 = vmatprep.subr.mxu0 0.0
    %1571 = vmatpush1.msra.mxu0 0.0
    %1572 = vmatprep.subr.mxu0 0.0
    %1573 = vmatpush1.msra.mxu0 0.0
    %1574 = vmatprep.subr.mxu0 0.0
    %1575 = vmatpush1.msra.mxu0 0.0
    %1576 = vmatprep.subr.mxu0 0.0
    %1577 = vmatpush1.msra.mxu0 0.0
    %1578 = vmatprep.subr.mxu0 0.0
    %1579 = vmatpush1.msra.mxu0 0.0
    %1580 = vmatprep.subr.mxu0 0.0
    %1581 = vmatpush1.msra.mxu0 0.0
    %1582 = vmatprep.subr.mxu0 0.0
    %1583 = vmatpush1.msra.mxu0 0.0
    %1584 = vmatprep.subr.mxu0 0.0
    %1585 = vmatpush1.msra.mxu0 0.0
    %1586 = vmatprep.subr.mxu0 0.0
    %1587 = vmatpush1.msra.mxu0 0.0
    %1588 = vmatprep.subr.mxu0 0.0
    %1589 = vmatpush1.msra.mxu0 0.0
    %1590 = vmatprep.subr.mxu0 0.0
    %1591 = vmatpush1.msra.mxu0 0.0
    %1592 = vmatprep.subr.mxu0 0.0
    %1593 = vmatpush1.msra.mxu0 0.0
    %1594 = vmatprep.subr.mxu0 0.0
    %1595 = vmatpush1.msra.mxu0 0.0
    %1596 = vmatprep.subr.mxu0 0.0
    %1597 = vmatpush1.msra.mxu0 0.0
    %1598 = vmatprep.subr.mxu0 0.0
    %1599 = vmatpush1.msra.mxu0 0.0
    %1600 = vmatprep.mubr.f32.mxu0 0.0
    %1601 = vmatmul.mubr.f32.gmra.mrb[0].mxu0 %v1534
    %v1602 = vpop.f32.mrb[0].mxu0
    %v1603 = vadd.f32 0.0, %v1602
    %v1604 = vpop.f32.mrb[0].mxu0
    %1605 = vdwg.mxu0
    %1607 = vrot.lane.b32.xlu0 %v1451, 8
    %v1608 = vpop.permute.xlu0 %1607
    %1611 = vrot.lane.b32.xlu0 %v1527, 16
    %v1612 = vpop.permute.xlu0 %1611
    %1615 = vrot.lane.b32.xlu0 %v1603, 24
    %v1616 = vpop.permute.xlu0 %1615
    %v1618 = vsel %vm226, %v1375, %v1608
    %v1619 = vsel %vm1298, %v1618, %v1612
    %v1620 = vsel %vm1300, %v1619, %v1616
    %v1621 = vld [vmem:[%s6] sm:$0xff]
    %v1622 = vld [vmem:[%s6 + $0x8] sm:$0xff]
    %v1623 = vld [vmem:[%s6 + $0x10] sm:$0xff]
    %v1624 = vld [vmem:[%s6 + $0x18] sm:$0xff]
    %v1625 = vld [vmem:[%s7] sm:$0x1]
    %v1627 = vlaneseq
    %v1628 = vshrl.u32 %v1627, 7
    %v1629 = vsub.s32 0, %v1628
    %v1630 = vrot.slane %v1625, %v1629
    %v1633 = vsel %vm80, %v1301, 0
    %v1636 = vsel %vm80, %v1620, 0
    %1638 = vmatprep.subr.mxu0 0.0
    %1639 = vmatpush1.msra.mxu0 %v1621
    %1640 = vmatprep.subr.mxu0 0.0
    %1641 = vmatpush1.msra.mxu0 %v1622
    %1642 = vmatprep.subr.mxu0 0.0
    %1643 = vmatpush1.msra.mxu0 %v1623
    %1644 = vmatprep.subr.mxu0 0.0
    %1645 = vmatpush1.msra.mxu0 %v1624
    %1646 = vmatprep.subr.mxu0 0.0
    %1647 = vmatpush1.msra.mxu0 0.0
    %1648 = vmatprep.subr.mxu0 0.0
    %1649 = vmatpush1.msra.mxu0 0.0
    %1650 = vmatprep.subr.mxu0 0.0
    %1651 = vmatpush1.msra.mxu0 0.0
    %1652 = vmatprep.subr.mxu0 0.0
    %1653 = vmatpush1.msra.mxu0 0.0
    %1654 = vmatprep.subr.mxu0 0.0
    %1655 = vmatpush1.msra.mxu0 0.0
    %1656 = vmatprep.subr.mxu0 0.0
    %1657 = vmatpush1.msra.mxu0 0.0
    %1658 = vmatprep.subr.mxu0 0.0
    %1659 = vmatpush1.msra.mxu0 0.0
    %1660 = vmatprep.subr.mxu0 0.0
    %1661 = vmatpush1.msra.mxu0 0.0
    %1662 = vmatprep.subr.mxu0 0.0
    %1663 = vmatpush1.msra.mxu0 0.0
    %1664 = vmatprep.subr.mxu0 0.0
    %1665 = vmatpush1.msra.mxu0 0.0
    %1666 = vmatprep.subr.mxu0 0.0
    %1667 = vmatpush1.msra.mxu0 0.0
    %1668 = vmatprep.subr.mxu0 0.0
    %1669 = vmatpush1.msra.mxu0 0.0
    %1670 = vmatprep.subr.mxu0 0.0
    %1671 = vmatpush1.msra.mxu0 0.0
    %1672 = vmatprep.subr.mxu0 0.0
    %1673 = vmatpush1.msra.mxu0 0.0
    %1674 = vmatprep.subr.mxu0 0.0
    %1675 = vmatpush1.msra.mxu0 0.0
    %1676 = vmatprep.subr.mxu0 0.0
    %1677 = vmatpush1.msra.mxu0 0.0
    %1678 = vmatprep.subr.mxu0 0.0
    %1679 = vmatpush1.msra.mxu0 0.0
    %1680 = vmatprep.subr.mxu0 0.0
    %1681 = vmatpush1.msra.mxu0 0.0
    %1682 = vmatprep.subr.mxu0 0.0
    %1683 = vmatpush1.msra.mxu0 0.0
    %1684 = vmatprep.subr.mxu0 0.0
    %1685 = vmatpush1.msra.mxu0 0.0
    %1686 = vmatprep.subr.mxu0 0.0
    %1687 = vmatpush1.msra.mxu0 0.0
    %1688 = vmatprep.subr.mxu0 0.0
    %1689 = vmatpush1.msra.mxu0 0.0
    %1690 = vmatprep.subr.mxu0 0.0
    %1691 = vmatpush1.msra.mxu0 0.0
    %1692 = vmatprep.subr.mxu0 0.0
    %1693 = vmatpush1.msra.mxu0 0.0
    %1694 = vmatprep.subr.mxu0 0.0
    %1695 = vmatpush1.msra.mxu0 0.0
    %1696 = vmatprep.subr.mxu0 0.0
    %1697 = vmatpush1.msra.mxu0 0.0
    %1698 = vmatprep.subr.mxu0 0.0
    %1699 = vmatpush1.msra.mxu0 0.0
    %1700 = vmatprep.subr.mxu0 0.0
    %1701 = vmatpush1.msra.mxu0 0.0
    %1702 = vmatprep.mubr.f32.mxu0 0.0
    %1703 = vmatmul.mubr.f32.gmra.mrb[0].mxu0 %v1633
    %v1704 = vpop.f32.mrb[0].mxu0
    %v1705 = vadd.f32 %v1630, %v1704
    %v1706 = vpop.f32.mrb[0].mxu0
    %1707 = vmatprep.mubr.f32.mxu0 0.0
    %1708 = vmatmul.mubr.f32.gmra.mrb[0].mxu0 %v1636
    %v1709 = vpop.f32.mrb[0].mxu0
    %v1710 = vadd.f32 %v1630, %v1709
    %v1711 = vpop.f32.mrb[0].mxu0
    %1712 = vdwg.mxu0
    %v1713 = vadd.f32 %v78, %v1705
    %v1714 = vadd.f32 %v79, %v1710
    %v1715 = vsel %vm80, %v1713, 0.0
    %1716 = vadd.xlane.f32.xlu0 %v1715
    %v1717 = vpop.xlane.xlu0 %1716
    %v1718 = vsel %vm80, %v1714, 0.0
    %1719 = vadd.xlane.f32.xlu0 %v1718
    %v1720 = vpop.xlane.xlu0 %1719
    %v1721 = vmul.f32 %v1717, %v87
    %v1722 = vmul.f32 %v1720, %v87
    %v1723 = vsub.f32 %v1713, %v1721
    %v1724 = vsub.f32 %v1714, %v1722
    %v1725 = vmul.f32 %v1723, %v1723
    %v1726 = vmul.f32 %v1724, %v1724
    %v1727 = vsel %vm80, %v1725, 0.0
    %1728 = vadd.xlane.f32.xlu0 %v1727
    %v1729 = vpop.xlane.xlu0 %1728
    %v1730 = vsel %vm80, %v1726, 0.0
    %1731 = vadd.xlane.f32.xlu0 %v1730
    %v1732 = vpop.xlane.xlu0 %1731
    %v1733 = vmul.f32 %v1729, %v87
    %v1734 = vmul.f32 %v1732, %v87
    %v1735 = vadd.f32 %v1733, 1e-06
    %v1736 = vadd.f32 %v1734, 1e-06
    %v1737 = vrsqrt.pop %v1735
    %v1738 = vrsqrt.pop %v1736
    %v1739 = vmul.f32 %v1723, %v1737
    %v1740 = vmul.f32 %v1724, %v1738
    %v1741 = vld [vmem:[%s8] sm:$0x1]
    %v1743 = vlaneseq
    %v1744 = vshrl.u32 %v1743, 7
    %v1745 = vsub.s32 0, %v1744
    %v1746 = vrot.slane %v1741, %v1745
    %v1748 = vmul.f32 %v1739, %v1746
    %v1749 = vmul.f32 %v1740, %v1746
    %v1750 = vld [vmem:[%s9] sm:$0x1]
    %v1752 = vlaneseq
    %v1753 = vshrl.u32 %v1752, 7
    %v1754 = vsub.s32 0, %v1753
    %v1755 = vrot.slane %v1750, %v1754
    %v1757 = vadd.f32 %v1748, %v1755
    %v1758 = vadd.f32 %v1749, %v1755
    %v1759 = vld [vmem:[%s10] sm:$0xff]
    %v1760 = vld [vmem:[%s10 + $0x8] sm:$0xff]
    %v1761 = vld [vmem:[%s10 + $0x10] sm:$0xff]
    %v1762 = vld [vmem:[%s10 + $0x18] sm:$0xff]
    %v1763 = vld [vmem:[%s11] sm:$0x1]
    %v1765 = vlaneseq
    %v1766 = vshrl.u32 %v1765, 7
    %v1767 = vsub.s32 0, %v1766
    %v1768 = vrot.slane %v1763, %v1767
    %v1771 = vsel %vm80, %v1757, 0
    %v1774 = vsel %vm80, %v1758, 0
    %1776 = vmatprep.subr.mxu0 0.0
    %1777 = vmatpush1.msra.mxu0 %v1759
    %1778 = vmatprep.subr.mxu0 0.0
    %1779 = vmatpush1.msra.mxu0 %v1760
    %1780 = vmatprep.subr.mxu0 0.0
    %1781 = vmatpush1.msra.mxu0 %v1761
    %1782 = vmatprep.subr.mxu0 0.0
    %1783 = vmatpush1.msra.mxu0 %v1762
    %1784 = vmatprep.subr.mxu0 0.0
    %1785 = vmatpush1.msra.mxu0 0.0
    %1786 = vmatprep.subr.mxu0 0.0
    %1787 = vmatpush1.msra.mxu0 0.0
    %1788 = vmatprep.subr.mxu0 0.0
    %1789 = vmatpush1.msra.mxu0 0.0
    %1790 = vmatprep.subr.mxu0 0.0
    %1791 = vmatpush1.msra.mxu0 0.0
    %1792 = vmatprep.subr.mxu0 0.0
    %1793 = vmatpush1.msra.mxu0 0.0
    %1794 = vmatprep.subr.mxu0 0.0
    %1795 = vmatpush1.msra.mxu0 0.0
    %1796 = vmatprep.subr.mxu0 0.0
    %1797 = vmatpush1.msra.mxu0 0.0
    %1798 = vmatprep.subr.mxu0 0.0
    %1799 = vmatpush1.msra.mxu0 0.0
    %1800 = vmatprep.subr.mxu0 0.0
    %1801 = vmatpush1.msra.mxu0 0.0
    %1802 = vmatprep.subr.mxu0 0.0
    %1803 = vmatpush1.msra.mxu0 0.0
    %1804 = vmatprep.subr.mxu0 0.0
    %1805 = vmatpush1.msra.mxu0 0.0
    %1806 = vmatprep.subr.mxu0 0.0
    %1807 = vmatpush1.msra.mxu0 0.0
    %1808 = vmatprep.subr.mxu0 0.0
    %1809 = vmatpush1.msra.mxu0 0.0
    %1810 = vmatprep.subr.mxu0 0.0
    %1811 = vmatpush1.msra.mxu0 0.0
    %1812 = vmatprep.subr.mxu0 0.0
    %1813 = vmatpush1.msra.mxu0 0.0
    %1814 = vmatprep.subr.mxu0 0.0
    %1815 = vmatpush1.msra.mxu0 0.0
    %1816 = vmatprep.subr.mxu0 0.0
    %1817 = vmatpush1.msra.mxu0 0.0
    %1818 = vmatprep.subr.mxu0 0.0
    %1819 = vmatpush1.msra.mxu0 0.0
    %1820 = vmatprep.subr.mxu0 0.0
    %1821 = vmatpush1.msra.mxu0 0.0
    %1822 = vmatprep.subr.mxu0 0.0
    %1823 = vmatpush1.msra.mxu0 0.0
    %1824 = vmatprep.subr.mxu0 0.0
    %1825 = vmatpush1.msra.mxu0 0.0
    %1826 = vmatprep.subr.mxu0 0.0
    %1827 = vmatpush1.msra.mxu0 0.0
    %1828 = vmatprep.subr.mxu0 0.0
    %1829 = vmatpush1.msra.mxu0 0.0
    %1830 = vmatprep.subr.mxu0 0.0
    %1831 = vmatpush1.msra.mxu0 0.0
    %1832 = vmatprep.subr.mxu0 0.0
    %1833 = vmatpush1.msra.mxu0 0.0
    %1834 = vmatprep.subr.mxu0 0.0
    %1835 = vmatpush1.msra.mxu0 0.0
    %1836 = vmatprep.subr.mxu0 0.0
    %1837 = vmatpush1.msra.mxu0 0.0
    %1838 = vmatprep.subr.mxu0 0.0
    %1839 = vmatpush1.msra.mxu0 0.0
    %1840 = vmatprep.mubr.f32.mxu0 0.0
    %1841 = vmatmul.mubr.f32.gmra.mrb[0].mxu0 %v1771
    %v1842 = vpop.f32.mrb[0].mxu0
    %v1843 = vadd.f32 %v1768, %v1842
    %v1844 = vpop.f32.mrb[0].mxu0
    %1845 = vmatprep.mubr.f32.mxu0 0.0
    %1846 = vmatmul.mubr.f32.gmra.mrb[0].mxu0 %v1774
    %v1847 = vpop.f32.mrb[0].mxu0
    %v1848 = vadd.f32 %v1768, %v1847
    %v1849 = vpop.f32.mrb[0].mxu0
    %1850 = vdwg.mxu0
    %v1851 = vmax.f32 %v1843, 0.0
    %v1852 = vmax.f32 %v1848, 0.0
    %v1853 = vld [vmem:[%s12] sm:$0xff]
    %v1854 = vld [vmem:[%s12 + $0x8] sm:$0xff]
    %v1855 = vld [vmem:[%s12 + $0x10] sm:$0xff]
    %v1856 = vld [vmem:[%s12 + $0x18] sm:$0xff]
    %v1857 = vld [vmem:[%s12 + $0x20] sm:$0xff]
    %v1858 = vld [vmem:[%s12 + $0x28] sm:$0xff]
    %v1859 = vld [vmem:[%s12 + $0x30] sm:$0xff]
    %v1860 = vld [vmem:[%s12 + $0x38] sm:$0xff]
    %v1861 = vld [vmem:[%s13] sm:$0x1]
    %v1863 = vlaneseq
    %v1864 = vshrl.u32 %v1863, 7
    %v1865 = vsub.s32 0, %v1864
    %v1866 = vrot.slane %v1861, %v1865
    %vm1868 = vcmask 523264
    %v1870 = vsel %vm1868, %v1851, 0
    %v1873 = vsel %vm1868, %v1852, 0
    %1875 = vmatprep.subr.mxu0 0.0
    %1876 = vmatpush1.msra.mxu0 %v1853
    %1877 = vmatprep.subr.mxu0 0.0
    %1878 = vmatpush1.msra.mxu0 %v1854
    %1879 = vmatprep.subr.mxu0 0.0
    %1880 = vmatpush1.msra.mxu0 %v1855
    %1881 = vmatprep.subr.mxu0 0.0
    %1882 = vmatpush1.msra.mxu0 %v1856
    %1883 = vmatprep.subr.mxu0 0.0
    %1884 = vmatpush1.msra.mxu0 %v1857
    %1885 = vmatprep.subr.mxu0 0.0
    %1886 = vmatpush1.msra.mxu0 %v1858
    %1887 = vmatprep.subr.mxu0 0.0
    %1888 = vmatpush1.msra.mxu0 %v1859
    %1889 = vmatprep.subr.mxu0 0.0
    %1890 = vmatpush1.msra.mxu0 %v1860
    %1891 = vmatprep.subr.mxu0 0.0
    %1892 = vmatpush1.msra.mxu0 0.0
    %1893 = vmatprep.subr.mxu0 0.0
    %1894 = vmatpush1.msra.mxu0 0.0
    %1895 = vmatprep.subr.mxu0 0.0
    %1896 = vmatpush1.msra.mxu0 0.0
    %1897 = vmatprep.subr.mxu0 0.0
    %1898 = vmatpush1.msra.mxu0 0.0
    %1899 = vmatprep.subr.mxu0 0.0
    %1900 = vmatpush1.msra.mxu0 0.0
    %1901 = vmatprep.subr.mxu0 0.0
    %1902 = vmatpush1.msra.mxu0 0.0
    %1903 = vmatprep.subr.mxu0 0.0
    %1904 = vmatpush1.msra.mxu0 0.0
    %1905 = vmatprep.subr.mxu0 0.0
    %1906 = vmatpush1.msra.mxu0 0.0
    %1907 = vmatprep.subr.mxu0 0.0
    %1908 = vmatpush1.msra.mxu0 0.0
    %1909 = vmatprep.subr.mxu0 0.0
    %1910 = vmatpush1.msra.mxu0 0.0
    %1911 = vmatprep.subr.mxu0 0.0
    %1912 = vmatpush1.msra.mxu0 0.0
    %1913 = vmatprep.subr.mxu0 0.0
    %1914 = vmatpush1.msra.mxu0 0.0
    %1915 = vmatprep.subr.mxu0 0.0
    %1916 = vmatpush1.msra.mxu0 0.0
    %1917 = vmatprep.subr.mxu0 0.0
    %1918 = vmatpush1.msra.mxu0 0.0
    %1919 = vmatprep.subr.mxu0 0.0
    %1920 = vmatpush1.msra.mxu0 0.0
    %1921 = vmatprep.subr.mxu0 0.0
    %1922 = vmatpush1.msra.mxu0 0.0
    %1923 = vmatprep.subr.mxu0 0.0
    %1924 = vmatpush1.msra.mxu0 0.0
    %1925 = vmatprep.subr.mxu0 0.0
    %1926 = vmatpush1.msra.mxu0 0.0
    %1927 = vmatprep.subr.mxu0 0.0
    %1928 = vmatpush1.msra.mxu0 0.0
    %1929 = vmatprep.subr.mxu0 0.0
    %1930 = vmatpush1.msra.mxu0 0.0
    %1931 = vmatprep.subr.mxu0 0.0
    %1932 = vmatpush1.msra.mxu0 0.0
    %1933 = vmatprep.subr.mxu0 0.0
    %1934 = vmatpush1.msra.mxu0 0.0
    %1935 = vmatprep.subr.mxu0 0.0
    %1936 = vmatpush1.msra.mxu0 0.0
    %1937 = vmatprep.subr.mxu0 0.0
    %1938 = vmatpush1.msra.mxu0 0.0
    %1939 = vmatprep.mubr.f32.mxu0 0.0
    %1940 = vmatmul.mubr.f32.gmra.mrb[0].mxu0 %v1870
    %v1941 = vpop.f32.mrb[0].mxu0
    %v1942 = vadd.f32 %v1866, %v1941
    %v1943 = vpop.f32.mrb[0].mxu0
    %1944 = vmatprep.mubr.f32.mxu0 0.0
    %1945 = vmatmul.mubr.f32.gmra.mrb[0].mxu0 %v1873
    %v1946 = vpop.f32.mrb[0].mxu0
    %v1947 = vadd.f32 %v1866, %v1946
    %v1948 = vpop.f32.mrb[0].mxu0
    %1949 = vdwg.mxu0
    %v1950 = vadd.f32 %v1713, %v1942
    %v1951 = vadd.f32 %v1714, %v1947
    %1952 = vst.msk [vmem:[#allocation7] sm:$0xff] %vm80, %v1950
    %1953 = vst.msk [vmem:[#allocation7 + $0x8] sm:$0xff] %vm80, %v1951
    // Predicated region
    $region66: #{tpu_custom_call.1} parent=1 // pred_check
      _
    $region67: #{tpu_custom_call.1} parent=1 // pred_check_branch
      %1955 = sbr.rel (0) target = $region69
    $region68: #{tpu_custom_call.1} parent=1 // pred_region
      %s1957 = ssub.s32 256, 256
      %1958 = vsyncadd [#allocation4], %s1957
      %s1959 = sshll.u32 [#allocation7], 4
      %s1960 = int_to_ptr.vmem [resolvable:$true] %s1959
      %1965 = dma.vmem_to_hbm [thread:$0]  %s1960, 256, %s14, [#allocation4], 128, 128, 8
    $region69: #{tpu_custom_call.1} parent=1 // pred_fallthru
      _
    // Predicated region
    $region70: #{tpu_custom_call.1} parent=1 // pred_check
      _
    $region71: #{tpu_custom_call.1} parent=1 // pred_check_branch
      %1967 = sbr.rel (0) target = $region73
    $region72: #{tpu_custom_call.1} parent=1 // pred_region
      %s1969 = ssub.s32 1024, 1024
      %1970 = vsyncadd [#allocation9], %s1969
      %s1971 = sshll.u32 [#allocation8], 4
      %s1972 = int_to_ptr.vmem [resolvable:$true] %s1971
      %1977 = dma.vmem_to_hbm [thread:$0]  %s1972, 1024, %s15, [#allocation9], 128, 128, 8
    $region73: #{tpu_custom_call.1} parent=1 // pred_fallthru
      _
    // Predicated region
    $region74: #{tpu_custom_call.1} parent=1 // pred_check
      _
    $region75: #{tpu_custom_call.1} parent=1 // pred_check_branch
      %1979 = sbr.rel (0) target = $region77
    $region76: #{tpu_custom_call.1} parent=1 // pred_region
      %1980 = dma.done [#allocation4], 256
    $region77: #{tpu_custom_call.1} parent=1 // pred_fallthru
      _
    // Predicated region
    $region78: #{tpu_custom_call.1} parent=1 // pred_check
      _
    $region79: #{tpu_custom_call.1} parent=1 // pred_check_branch
      %1982 = sbr.rel (0) target = $region81
    $region80: #{tpu_custom_call.1} parent=1 // pred_region
      %1983 = dma.done [#allocation9], 1024
    $region81: #{tpu_custom_call.1} parent=1 // pred_fallthru
      _
    %1984 = vsyncpa [#allocation3], 1
    %1985 = vsyncpa [#allocation4], 1
    %1986 = vsyncpa [#allocation9], 1
    %1987 = vsyncpa [#allocation5], 1

</llo_original>
